<compile_context>
chip_gen: v6e
topology: v6e:2x2x1
jax: 0.10.0
libtpu: 0.0.40
codegen_flags: <defaults>
</compile_context>

<pallas_src>
import functools

import jax
import jax.numpy as jnp
from jax import lax
from jax.experimental import pallas as pl
from jax.experimental.pallas import tpu as pltpu


# ----------------------------------------------------------------------------
# In-kernel helpers
# ----------------------------------------------------------------------------
def _layer_norm(x, w, b, eps=1e-5):
    # PyTorch LayerNorm over the last dim (biased variance).
    mu = jnp.mean(x, axis=-1, keepdims=True)
    var = jnp.mean(jnp.square(x - mu), axis=-1, keepdims=True)
    return (x - mu) * lax.rsqrt(var + eps) * w + b


def _linear(x, w, b=None):
    # PyTorch nn.Linear convention: w is (out, in); y = x @ w.T + b.
    # x is cast to the weight dtype (bf16) -> native MXU path, f32 accumulation.
    y = lax.dot_general(x.astype(w.dtype), w, (((1,), (1,)), ((), ())),
                        preferred_element_type=jnp.float32)
    return y if b is None else y + b


# ----------------------------------------------------------------------------
# Fused forward kernel.  grid = (batch, num_layers):
#   axis 0 ("parallel")  -> one sequence per tile
#   axis 1 ("arbitrary") -> encoder layers; activations stay in VMEM scratch
# ----------------------------------------------------------------------------
def fused_forward_kernel(x_ref, pe_ref,
                         wq_ref, bq_ref, wk_ref, bk_ref, wv_ref, bv_ref,
                         wo_ref, bo_ref, ln1w_ref, ln1b_ref,
                         w1_ref, b1_ref, w2_ref, b2_ref,
                         ln2w_ref, ln2b_ref, fcw_ref, fcb_ref,
                         out_ref, x_scr, *, nhead):
    layer = pl.program_id(1)
    n_layers = pl.num_programs(1)

    # First layer step of this sequence: PositionalEncoder.forward
    # (x = x + pe[:, :seq_len]; dropout = identity at inference).
    @pl.when(layer == 0)
    def _():
        x_scr[...] = x_ref[...] + pe_ref[...]

    x = x_scr[...]                                   # (S, E) f32
    s_len, e = x.shape
    dh = e // nhead
    scale = 1.0 / float(dh) ** 0.5

    # --- self attention (within one sequence -> no mask needed) --------------
    q = _linear(x, wq_ref[...], bq_ref[...])         # (S, E) f32
    k = _linear(x, wk_ref[...], bk_ref[...])
    v = _linear(x, wv_ref[...], bv_ref[...])

    ctxs = []
    for h in range(nhead):                           # static unroll, small nhead
        # TODO(synk): a head-batched dot_general would also remove these small
        # lane slices; kept as 2-D matmuls for robust Mosaic lowering.
        sl = slice(h * dh, (h + 1) * dh)
        qh = q[:, sl].astype(jnp.bfloat16)
        kh = k[:, sl].astype(jnp.bfloat16)
        s = lax.dot_general(qh, kh, (((1,), (1,)), ((), ())),
                            preferred_element_type=jnp.float32) * scale
        s = s - jnp.max(s, axis=-1, keepdims=True)
        p = jnp.exp(s)
        p = p * pl.reciprocal(jnp.sum(p, axis=-1, keepdims=True), approx=True)
        ctxs.append(jnp.dot(p.astype(jnp.bfloat16),
                            v[:, sl].astype(jnp.bfloat16),
                            preferred_element_type=jnp.float32))    # (S, dh)
    ctx = jnp.concatenate(ctxs, axis=-1)             # (S, E)
    attn = _linear(ctx, wo_ref[...], bo_ref[...])    # single K=E Wo matmul

    # residual + LayerNorm1 (post-norm, PyTorch default)
    src = _layer_norm(x + attn, ln1w_ref[...], ln1b_ref[...])

    # --- feed-forward (dim_feedforward == E, ReLU) ----------------------------
    h1 = jnp.maximum(_linear(src, w1_ref[...], b1_ref[...]), 0.0)
    h2 = _linear(h1, w2_ref[...], b2_ref[...])

    # residual + LayerNorm2; activations stay resident in VMEM scratch.
    out = _layer_norm(src + h2, ln2w_ref[...], ln2b_ref[...])
    x_scr[...] = out

    # Last layer step: CLS token (position 0 of this sequence) + fc head.
    @pl.when(layer == n_layers - 1)
    def _():
        cls = out[0:1, :]                            # (1, E)
        out_ref[...] = _linear(cls, fcw_ref[...], fcb_ref[...]).astype(out_ref.dtype)


# ----------------------------------------------------------------------------
# Wrapper
# ----------------------------------------------------------------------------
def fused_forward(x_emb, pe, lp, fc_w, fc_b, *, nhead):
    b, s, e = x_emb.shape
    out_dim = fc_w.shape[0]
    n_layers = lp['wq'].shape[0]
    f_ff = lp['w1'].shape[1]
    fc_b2 = fc_b.reshape(1, -1)

    args = (x_emb, pe,
            lp['wq'], lp['bq'], lp['wk'], lp['bk'], lp['wv'], lp['bv'],
            lp['wo'], lp['bo'], lp['ln1w'], lp['ln1b'],
            lp['w1'], lp['b1'], lp['w2'], lp['b2'],
            lp['ln2w'], lp['ln2b'], fc_w, fc_b2)

    def seq_spec(shape):         # (B, r, c): one sequence per grid tile
        return pl.BlockSpec((None,) + tuple(shape[1:]), lambda bi, li: (bi, 0, 0))

    def layer_spec(shape):       # (L, r, c): per-layer stacked parameters
        return pl.BlockSpec((None,) + tuple(shape[1:]), lambda bi, li: (li, 0, 0))

    def shared_spec(shape):      # rank-2, grid-invariant
        return pl.BlockSpec(tuple(shape), lambda bi, li: (0,) * len(shape))

    in_specs = [seq_spec(x_emb.shape), shared_spec(pe.shape)]
    in_specs += [layer_spec(a.shape) for a in args[2:18]]
    in_specs += [shared_spec(fc_w.shape), shared_spec(fc_b2.shape)]

    # --- explicit VMEM budget (v7x has 64 MiB; keep headroom) -----------------
    def _blk_bytes(a, per_layer=False, per_seq=False):
        n = int(a.size)
        if per_layer:
            n //= n_layers
        if per_seq:
            n //= b
        return n * a.dtype.itemsize

    layer_bytes = sum(_blk_bytes(a, per_layer=True) for a in args[2:18])
    shared_bytes = (_blk_bytes(x_emb, per_seq=True) + _blk_bytes(pe)
                    + _blk_bytes(fc_w) + _blk_bytes(fc_b2))
    scratch_bytes = s * e * 4
    out_bytes = out_dim * 4
    footprint = 2 * (layer_bytes + shared_bytes + out_bytes) + scratch_bytes
    vmem_limit = int(min(max(4 * footprint, 16 * 1024 * 1024), 48 * 1024 * 1024))

    flops = n_layers * b * (6 * s * e * e            # q/k/v projections
                            + 4 * s * s * e          # scores + p@v (all heads)
                            + 2 * s * e * e          # output projection
                            + 4 * s * e * f_ff)      # FFN
    cost = pl.CostEstimate(
        flops=int(flops),
        transcendentals=int(n_layers * b * nhead * s * s),
        bytes_accessed=int(b * sum(int(a.size) * a.dtype.itemsize for a in args[2:18])
                           + sum(int(a.size) * a.dtype.itemsize
                                 for a in (x_emb, pe, fc_w, fc_b2))
                           + b * out_dim * 4))

    out = pl.pallas_call(
        functools.partial(fused_forward_kernel, nhead=nhead),
        grid_spec=pltpu.PrefetchScalarGridSpec(
            num_scalar_prefetch=0,
            grid=(b, n_layers),
            in_specs=in_specs,
            out_specs=pl.BlockSpec((None, 1, out_dim), lambda bi, li: (bi, 0, 0)),
            scratch_shapes=[pltpu.VMEM((s, e), jnp.float32)]),
        out_shape=jax.ShapeDtypeStruct((b, 1, out_dim), jnp.float32),
        compiler_params=pltpu.CompilerParams(
            dimension_semantics=("parallel", "arbitrary"),
            vmem_limit_bytes=vmem_limit),
        cost_estimate=cost,
    )(*args)
    return out.reshape(b, out_dim)


# ----------------------------------------------------------------------------
# Model setup (parameters + plain-JAX glue)
# ----------------------------------------------------------------------------
def make_positional_encoding(max_seq_len, d):
    # Mirrors the PyTorch loop: pe[pos, i]   = sin(pos / 10000**(2*i/d)),
    #                           pe[pos, i+1] = cos(pos / 10000**(2*i/d)),
    # with i stepping over the even indices.
    pos = jnp.arange(max_seq_len, dtype=jnp.float32)[:, None]
    i = jnp.arange(0, d, 2, dtype=jnp.float32)[None, :]
    denom = jnp.power(jnp.float32(10000.0), 2.0 * i / d)
    pe = jnp.zeros((max_seq_len, d), dtype=jnp.float32)
    pe = pe.at[:, 0::2].set(jnp.sin(pos / denom))
    pe = pe.at[:, 1::2].set(jnp.cos(pos / denom))
    return pe


def init_params(vocab_size, embed_size, nhead, num_layers, output_size, seed=0):
    e = embed_size
    f = embed_size               # dim_feedforward == embed_size in the module
    nl = num_layers
    ks = jax.random.split(jax.random.PRNGKey(seed), 9)

    def rnd(key, shape, scale=0.02):
        return (scale * jax.random.normal(key, shape)).astype(jnp.float32)

    layers = {
        # Weight matrices in bf16 (MXU fast path, f32 accumulation in-kernel);
        # biases / LayerNorm params stay f32.
        'wq':   rnd(ks[0], (nl, e, e)).astype(jnp.bfloat16),
        'bq':   jnp.zeros((nl, 1, e), jnp.float32),
        'wk':   rnd(ks[1], (nl, e, e)).astype(jnp.bfloat16),
        'bk':   jnp.zeros((nl, 1, e), jnp.float32),
        'wv':   rnd(ks[2], (nl, e, e)).astype(jnp.bfloat16),
        'bv':   jnp.zeros((nl, 1, e), jnp.float32),
        'wo':   rnd(ks[3], (nl, e, e)).astype(jnp.bfloat16),
        'bo':   jnp.zeros((nl, 1, e), jnp.float32),
        'ln1w': jnp.ones((nl, 1, e), jnp.float32),
        'ln1b': jnp.zeros((nl, 1, e), jnp.float32),
        'w1':   rnd(ks[4], (nl, f, e)).astype(jnp.bfloat16),
        'b1':   jnp.zeros((nl, 1, f), jnp.float32),
        'w2':   rnd(ks[5], (nl, e, f)).astype(jnp.bfloat16),
        'b2':   jnp.zeros((nl, 1, e), jnp.float32),
        'ln2w': jnp.ones((nl, 1, e), jnp.float32),
        'ln2b': jnp.zeros((nl, 1, e), jnp.float32),
    }
    return {
        'embedding': rnd(ks[6], (vocab_size, e), 1.0),
        'pe': make_positional_encoding(500, e),
        'layers': layers,
        'fc_w': rnd(ks[7], (output_size, e)),
        'fc_b': jnp.zeros((output_size,), jnp.float32),
    }


def network_forward(tokens, params, nhead):
    b, s = tokens.shape
    e = params['embedding'].shape[1]
    # TODO(synk): embedding row-gather is data-dependent; kept in plain JAX.
    x = jnp.take(params['embedding'], tokens.reshape(-1), axis=0).reshape(b, s, e)
    pe = params['pe'][:s]        # (S, E); broadcast over batch happens in-kernel
    return fused_forward(x, pe, params['layers'], params['fc_w'], params['fc_b'],
                         nhead=nhead)


# ----------------------------------------------------------------------------
if __name__ == "__main__":
    vocab_size = 50
    embed_size = 32
    nhead = 4
    num_encoder_layers = 2
    output_size = 8
    batch, seq = 2, 8

    params = init_params(vocab_size, embed_size, nhead, num_encoder_layers, output_size)
    tokens = jax.random.randint(jax.random.PRNGKey(0), (batch, seq), 0, vocab_size,
                                dtype=jnp.int32)

    fwd = jax.jit(network_forward, static_argnums=2)
    out = jax.block_until_ready(fwd(tokens, params, nhead))
    assert out.shape == (batch, output_size), out.shape
    assert bool(jnp.all(jnp.isfinite(out))), "non-finite output"
    print("KERNEL_OK")
</pallas_src>

<mosaic_0001>
module attributes {stable_mosaic.version = 11 : i64} {
  func.func @fused_forward_kernel(%arg0: i32, %arg1: i32, %arg2: memref<1x8x32xf32, #tpu.memory_space<vmem>>, %arg3: memref<8x32xf32, #tpu.memory_space<vmem>>, %arg4: memref<1x32x32xbf16, #tpu.memory_space<vmem>>, %arg5: memref<1x1x32xf32, #tpu.memory_space<vmem>>, %arg6: memref<1x32x32xbf16, #tpu.memory_space<vmem>>, %arg7: memref<1x1x32xf32, #tpu.memory_space<vmem>>, %arg8: memref<1x32x32xbf16, #tpu.memory_space<vmem>>, %arg9: memref<1x1x32xf32, #tpu.memory_space<vmem>>, %arg10: memref<1x32x32xbf16, #tpu.memory_space<vmem>>, %arg11: memref<1x1x32xf32, #tpu.memory_space<vmem>>, %arg12: memref<1x1x32xf32, #tpu.memory_space<vmem>>, %arg13: memref<1x1x32xf32, #tpu.memory_space<vmem>>, %arg14: memref<1x32x32xbf16, #tpu.memory_space<vmem>>, %arg15: memref<1x1x32xf32, #tpu.memory_space<vmem>>, %arg16: memref<1x32x32xbf16, #tpu.memory_space<vmem>>, %arg17: memref<1x1x32xf32, #tpu.memory_space<vmem>>, %arg18: memref<1x1x32xf32, #tpu.memory_space<vmem>>, %arg19: memref<1x1x32xf32, #tpu.memory_space<vmem>>, %arg20: memref<8x32xf32, #tpu.memory_space<vmem>>, %arg21: memref<1x8xf32, #tpu.memory_space<vmem>>, %arg22: memref<1x1x8xf32, #tpu.memory_space<vmem>>, %arg23: memref<8x32xf32, #tpu.memory_space<vmem>>) attributes {dimension_semantics = [#tpu.dimension_semantics<parallel>, #tpu.dimension_semantics<arbitrary>], iteration_bounds = array<i64: 2, 2>, scalar_prefetch = 0 : i64, scratch_operands = 1 : i64, tpu.core_type = #tpu.core_type<tc>, window_params = [{transform_indices = @transform_0, window_bounds = array<i64: 1, 8, 32>}, {pipeline_mode = #tpu.pipeline_mode<synchronous>, transform_indices = @transform_1, window_bounds = array<i64: 8, 32>}, {transform_indices = @transform_2, window_bounds = array<i64: 1, 32, 32>}, {transform_indices = @transform_3, window_bounds = array<i64: 1, 1, 32>}, {transform_indices = @transform_4, window_bounds = array<i64: 1, 32, 32>}, {transform_indices = @transform_5, window_bounds = array<i64: 1, 1, 32>}, {transform_indices = @transform_6, window_bounds = array<i64: 1, 32, 32>}, {transform_indices = @transform_7, window_bounds = array<i64: 1, 1, 32>}, {transform_indices = @transform_8, window_bounds = array<i64: 1, 32, 32>}, {transform_indices = @transform_9, window_bounds = array<i64: 1, 1, 32>}, {transform_indices = @transform_10, window_bounds = array<i64: 1, 1, 32>}, {transform_indices = @transform_11, window_bounds = array<i64: 1, 1, 32>}, {transform_indices = @transform_12, window_bounds = array<i64: 1, 32, 32>}, {transform_indices = @transform_13, window_bounds = array<i64: 1, 1, 32>}, {transform_indices = @transform_14, window_bounds = array<i64: 1, 32, 32>}, {transform_indices = @transform_15, window_bounds = array<i64: 1, 1, 32>}, {transform_indices = @transform_16, window_bounds = array<i64: 1, 1, 32>}, {transform_indices = @transform_17, window_bounds = array<i64: 1, 1, 32>}, {pipeline_mode = #tpu.pipeline_mode<synchronous>, transform_indices = @transform_18, window_bounds = array<i64: 8, 32>}, {pipeline_mode = #tpu.pipeline_mode<synchronous>, transform_indices = @transform_19, window_bounds = array<i64: 1, 8>}, {transform_indices = @transform_20, window_bounds = array<i64: 1, 1, 8>}]} {
    %c0_i32 = arith.constant 0 : i32
    %0 = arith.cmpi eq, %arg1, %c0_i32 : i32
    %1 = arith.extui %0 : i1 to i32
    %c0_i32_0 = arith.constant 0 : i32
    %2 = arith.cmpi ne, %1, %c0_i32_0 : i32
    scf.if %2 {
      %c0_89 = arith.constant 0 : index
      %c0_90 = arith.constant 0 : index
      %c0_91 = arith.constant 0 : index
      %197 = vector.load %arg2[%c0_89, %c0_90, %c0_91] : memref<1x8x32xf32, #tpu.memory_space<vmem>>, vector<1x8x32xf32>
      %198 = vector.shape_cast %197 : vector<1x8x32xf32> to vector<8x32xf32>
      %c0_92 = arith.constant 0 : index
      %c0_93 = arith.constant 0 : index
      %199 = vector.load %arg3[%c0_92, %c0_93] : memref<8x32xf32, #tpu.memory_space<vmem>>, vector<8x32xf32>
      %200 = arith.addf %198, %199 : vector<8x32xf32>
      %c0_94 = arith.constant 0 : index
      %c0_95 = arith.constant 0 : index
      %201 = vector.load %arg23[%c0_94, %c0_95] : memref<8x32xf32, #tpu.memory_space<vmem>>, vector<8x32xf32>
      tpu.vector_store %arg23[%c0_94, %c0_95], %200 {strides = array<i32>} : memref<8x32xf32, #tpu.memory_space<vmem>>, vector<8x32xf32>,
    } else {
    }
    %c0 = arith.constant 0 : index
    %c0_1 = arith.constant 0 : index
    %3 = vector.load %arg23[%c0, %c0_1] : memref<8x32xf32, #tpu.memory_space<vmem>>, vector<8x32xf32>
    %c0_2 = arith.constant 0 : index
    %c0_3 = arith.constant 0 : index
    %c0_4 = arith.constant 0 : index
    %4 = vector.load %arg4[%c0_2, %c0_3, %c0_4] : memref<1x32x32xbf16, #tpu.memory_space<vmem>>, vector<1x32x32xbf16>
    %5 = vector.shape_cast %4 : vector<1x32x32xbf16> to vector<32x32xbf16>
    %c0_5 = arith.constant 0 : index
    %c0_6 = arith.constant 0 : index
    %c0_7 = arith.constant 0 : index
    %6 = vector.load %arg5[%c0_5, %c0_6, %c0_7] : memref<1x1x32xf32, #tpu.memory_space<vmem>>, vector<1x1x32xf32>
    %7 = vector.shape_cast %6 : vector<1x1x32xf32> to vector<1x32xf32>
    %8 = arith.truncf %3 : vector<8x32xf32> to vector<8x32xbf16>
    %cst = arith.constant dense<0.000000e+00> : vector<8x32xf32>
    %9 = tpu.matmul %8, %5, %cst {dimension_numbers = #tpu.dot_dimension_numbers<[1], [1], [0], [0], [0, 0, 1, 0], [], []>} : vector<8x32xbf16>, vector<32x32xbf16>, vector<8x32xf32> -> vector<8x32xf32>
    %10 = vector.broadcast %7 : vector<1x32xf32> to vector<8x32xf32>
    %11 = arith.addf %9, %10 : vector<8x32xf32>
    %c0_8 = arith.constant 0 : index
    %c0_9 = arith.constant 0 : index
    %c0_10 = arith.constant 0 : index
    %12 = vector.load %arg6[%c0_8, %c0_9, %c0_10] : memref<1x32x32xbf16, #tpu.memory_space<vmem>>, vector<1x32x32xbf16>
    %13 = vector.shape_cast %12 : vector<1x32x32xbf16> to vector<32x32xbf16>
    %c0_11 = arith.constant 0 : index
    %c0_12 = arith.constant 0 : index
    %c0_13 = arith.constant 0 : index
    %14 = vector.load %arg7[%c0_11, %c0_12, %c0_13] : memref<1x1x32xf32, #tpu.memory_space<vmem>>, vector<1x1x32xf32>
    %15 = vector.shape_cast %14 : vector<1x1x32xf32> to vector<1x32xf32>
    %16 = arith.truncf %3 : vector<8x32xf32> to vector<8x32xbf16>
    %cst_14 = arith.constant dense<0.000000e+00> : vector<8x32xf32>
    %17 = tpu.matmul %16, %13, %cst_14 {dimension_numbers = #tpu.dot_dimension_numbers<[1], [1], [0], [0], [0, 0, 1, 0], [], []>} : vector<8x32xbf16>, vector<32x32xbf16>, vector<8x32xf32> -> vector<8x32xf32>
    %18 = vector.broadcast %15 : vector<1x32xf32> to vector<8x32xf32>
    %19 = arith.addf %17, %18 : vector<8x32xf32>
    %c0_15 = arith.constant 0 : index
    %c0_16 = arith.constant 0 : index
    %c0_17 = arith.constant 0 : index
    %20 = vector.load %arg8[%c0_15, %c0_16, %c0_17] : memref<1x32x32xbf16, #tpu.memory_space<vmem>>, vector<1x32x32xbf16>
    %21 = vector.shape_cast %20 : vector<1x32x32xbf16> to vector<32x32xbf16>
    %c0_18 = arith.constant 0 : index
    %c0_19 = arith.constant 0 : index
    %c0_20 = arith.constant 0 : index
    %22 = vector.load %arg9[%c0_18, %c0_19, %c0_20] : memref<1x1x32xf32, #tpu.memory_space<vmem>>, vector<1x1x32xf32>
    %23 = vector.shape_cast %22 : vector<1x1x32xf32> to vector<1x32xf32>
    %24 = arith.truncf %3 : vector<8x32xf32> to vector<8x32xbf16>
    %cst_21 = arith.constant dense<0.000000e+00> : vector<8x32xf32>
    %25 = tpu.matmul %24, %21, %cst_21 {dimension_numbers = #tpu.dot_dimension_numbers<[1], [1], [0], [0], [0, 0, 1, 0], [], []>} : vector<8x32xbf16>, vector<32x32xbf16>, vector<8x32xf32> -> vector<8x32xf32>
    %26 = vector.broadcast %23 : vector<1x32xf32> to vector<8x32xf32>
    %27 = arith.addf %25, %26 : vector<8x32xf32>
    %28 = vector.extract_strided_slice %11 {offsets = [0, 0], sizes = [8, 8], strides = [1, 1]} : vector<8x32xf32> to vector<8x8xf32>
    %29 = arith.truncf %28 : vector<8x8xf32> to vector<8x8xbf16>
    %30 = vector.extract_strided_slice %19 {offsets = [0, 0], sizes = [8, 8], strides = [1, 1]} : vector<8x32xf32> to vector<8x8xf32>
    %31 = arith.truncf %30 : vector<8x8xf32> to vector<8x8xbf16>
    %cst_22 = arith.constant dense<0.000000e+00> : vector<8x8xf32>
    %32 = tpu.matmul %29, %31, %cst_22 {dimension_numbers = #tpu.dot_dimension_numbers<[1], [1], [0], [0], [0, 0, 1, 0], [], []>} : vector<8x8xbf16>, vector<8x8xbf16>, vector<8x8xf32> -> vector<8x8xf32>
    %cst_23 = arith.constant 0.353553385 : f32
    %33 = vector.broadcast %cst_23 : f32 to vector<8x8xf32>
    %34 = arith.mulf %32, %33 : vector<8x8xf32>
    %cst_24 = arith.constant dense<0xFF800000> : vector<8xf32>
    %35 = vector.multi_reduction <maximumf>, %34, %cst_24 [1] : vector<8x8xf32> to vector<8xf32>
    %36 = vector.shape_cast %35 : vector<8xf32> to vector<8x1xf32>
    %37 = vector.broadcast %36 : vector<8x1xf32> to vector<8x8xf32>
    %38 = arith.subf %34, %37 : vector<8x8xf32>
    %39 = math.exp %38 : vector<8x8xf32>
    %cst_25 = arith.constant dense<0.000000e+00> : vector<8xf32>
    %40 = vector.multi_reduction <add>, %39, %cst_25 [1] : vector<8x8xf32> to vector<8xf32>
    %41 = vector.shape_cast %40 : vector<8xf32> to vector<8x1xf32>
    %42 = tpu.reciprocal %41 {approx = true} : vector<8x1xf32> -> vector<8x1xf32>
    %43 = vector.broadcast %42 : vector<8x1xf32> to vector<8x8xf32>
    %44 = arith.mulf %39, %43 : vector<8x8xf32>
    %45 = arith.truncf %44 : vector<8x8xf32> to vector<8x8xbf16>
    %46 = vector.extract_strided_slice %27 {offsets = [0, 0], sizes = [8, 8], strides = [1, 1]} : vector<8x32xf32> to vector<8x8xf32>
    %47 = arith.truncf %46 : vector<8x8xf32> to vector<8x8xbf16>
    %cst_26 = arith.constant dense<0.000000e+00> : vector<8x8xf32>
    %48 = tpu.matmul %45, %47, %cst_26 {dimension_numbers = #tpu.dot_dimension_numbers<[1], [0], [0], [1], [0, 0, 1, 1], [], []>} : vector<8x8xbf16>, vector<8x8xbf16>, vector<8x8xf32> -> vector<8x8xf32>
    %49 = vector.extract_strided_slice %11 {offsets = [0, 8], sizes = [8, 8], strides = [1, 1]} : vector<8x32xf32> to vector<8x8xf32>
    %50 = arith.truncf %49 : vector<8x8xf32> to vector<8x8xbf16>
    %51 = vector.extract_strided_slice %19 {offsets = [0, 8], sizes = [8, 8], strides = [1, 1]} : vector<8x32xf32> to vector<8x8xf32>
    %52 = arith.truncf %51 : vector<8x8xf32> to vector<8x8xbf16>
    %cst_27 = arith.constant dense<0.000000e+00> : vector<8x8xf32>
    %53 = tpu.matmul %50, %52, %cst_27 {dimension_numbers = #tpu.dot_dimension_numbers<[1], [1], [0], [0], [0, 0, 1, 0], [], []>} : vector<8x8xbf16>, vector<8x8xbf16>, vector<8x8xf32> -> vector<8x8xf32>
    %cst_28 = arith.constant 0.353553385 : f32
    %54 = vector.broadcast %cst_28 : f32 to vector<8x8xf32>
    %55 = arith.mulf %53, %54 : vector<8x8xf32>
    %cst_29 = arith.constant dense<0xFF800000> : vector<8xf32>
    %56 = vector.multi_reduction <maximumf>, %55, %cst_29 [1] : vector<8x8xf32> to vector<8xf32>
    %57 = vector.shape_cast %56 : vector<8xf32> to vector<8x1xf32>
    %58 = vector.broadcast %57 : vector<8x1xf32> to vector<8x8xf32>
    %59 = arith.subf %55, %58 : vector<8x8xf32>
    %60 = math.exp %59 : vector<8x8xf32>
    %cst_30 = arith.constant dense<0.000000e+00> : vector<8xf32>
    %61 = vector.multi_reduction <add>, %60, %cst_30 [1] : vector<8x8xf32> to vector<8xf32>
    %62 = vector.shape_cast %61 : vector<8xf32> to vector<8x1xf32>
    %63 = tpu.reciprocal %62 {approx = true} : vector<8x1xf32> -> vector<8x1xf32>
    %64 = vector.broadcast %63 : vector<8x1xf32> to vector<8x8xf32>
    %65 = arith.mulf %60, %64 : vector<8x8xf32>
    %66 = arith.truncf %65 : vector<8x8xf32> to vector<8x8xbf16>
    %67 = vector.extract_strided_slice %27 {offsets = [0, 8], sizes = [8, 8], strides = [1, 1]} : vector<8x32xf32> to vector<8x8xf32>
    %68 = arith.truncf %67 : vector<8x8xf32> to vector<8x8xbf16>
    %cst_31 = arith.constant dense<0.000000e+00> : vector<8x8xf32>
    %69 = tpu.matmul %66, %68, %cst_31 {dimension_numbers = #tpu.dot_dimension_numbers<[1], [0], [0], [1], [0, 0, 1, 1], [], []>} : vector<8x8xbf16>, vector<8x8xbf16>, vector<8x8xf32> -> vector<8x8xf32>
    %70 = vector.extract_strided_slice %11 {offsets = [0, 16], sizes = [8, 8], strides = [1, 1]} : vector<8x32xf32> to vector<8x8xf32>
    %71 = arith.truncf %70 : vector<8x8xf32> to vector<8x8xbf16>
    %72 = vector.extract_strided_slice %19 {offsets = [0, 16], sizes = [8, 8], strides = [1, 1]} : vector<8x32xf32> to vector<8x8xf32>
    %73 = arith.truncf %72 : vector<8x8xf32> to vector<8x8xbf16>
    %cst_32 = arith.constant dense<0.000000e+00> : vector<8x8xf32>
    %74 = tpu.matmul %71, %73, %cst_32 {dimension_numbers = #tpu.dot_dimension_numbers<[1], [1], [0], [0], [0, 0, 1, 0], [], []>} : vector<8x8xbf16>, vector<8x8xbf16>, vector<8x8xf32> -> vector<8x8xf32>
    %cst_33 = arith.constant 0.353553385 : f32
    %75 = vector.broadcast %cst_33 : f32 to vector<8x8xf32>
    %76 = arith.mulf %74, %75 : vector<8x8xf32>
    %cst_34 = arith.constant dense<0xFF800000> : vector<8xf32>
    %77 = vector.multi_reduction <maximumf>, %76, %cst_34 [1] : vector<8x8xf32> to vector<8xf32>
    %78 = vector.shape_cast %77 : vector<8xf32> to vector<8x1xf32>
    %79 = vector.broadcast %78 : vector<8x1xf32> to vector<8x8xf32>
    %80 = arith.subf %76, %79 : vector<8x8xf32>
    %81 = math.exp %80 : vector<8x8xf32>
    %cst_35 = arith.constant dense<0.000000e+00> : vector<8xf32>
    %82 = vector.multi_reduction <add>, %81, %cst_35 [1] : vector<8x8xf32> to vector<8xf32>
    %83 = vector.shape_cast %82 : vector<8xf32> to vector<8x1xf32>
    %84 = tpu.reciprocal %83 {approx = true} : vector<8x1xf32> -> vector<8x1xf32>
    %85 = vector.broadcast %84 : vector<8x1xf32> to vector<8x8xf32>
    %86 = arith.mulf %81, %85 : vector<8x8xf32>
    %87 = arith.truncf %86 : vector<8x8xf32> to vector<8x8xbf16>
    %88 = vector.extract_strided_slice %27 {offsets = [0, 16], sizes = [8, 8], strides = [1, 1]} : vector<8x32xf32> to vector<8x8xf32>
    %89 = arith.truncf %88 : vector<8x8xf32> to vector<8x8xbf16>
    %cst_36 = arith.constant dense<0.000000e+00> : vector<8x8xf32>
    %90 = tpu.matmul %87, %89, %cst_36 {dimension_numbers = #tpu.dot_dimension_numbers<[1], [0], [0], [1], [0, 0, 1, 1], [], []>} : vector<8x8xbf16>, vector<8x8xbf16>, vector<8x8xf32> -> vector<8x8xf32>
    %91 = vector.extract_strided_slice %11 {offsets = [0, 24], sizes = [8, 8], strides = [1, 1]} : vector<8x32xf32> to vector<8x8xf32>
    %92 = arith.truncf %91 : vector<8x8xf32> to vector<8x8xbf16>
    %93 = vector.extract_strided_slice %19 {offsets = [0, 24], sizes = [8, 8], strides = [1, 1]} : vector<8x32xf32> to vector<8x8xf32>
    %94 = arith.truncf %93 : vector<8x8xf32> to vector<8x8xbf16>
    %cst_37 = arith.constant dense<0.000000e+00> : vector<8x8xf32>
    %95 = tpu.matmul %92, %94, %cst_37 {dimension_numbers = #tpu.dot_dimension_numbers<[1], [1], [0], [0], [0, 0, 1, 0], [], []>} : vector<8x8xbf16>, vector<8x8xbf16>, vector<8x8xf32> -> vector<8x8xf32>
    %cst_38 = arith.constant 0.353553385 : f32
    %96 = vector.broadcast %cst_38 : f32 to vector<8x8xf32>
    %97 = arith.mulf %95, %96 : vector<8x8xf32>
    %cst_39 = arith.constant dense<0xFF800000> : vector<8xf32>
    %98 = vector.multi_reduction <maximumf>, %97, %cst_39 [1] : vector<8x8xf32> to vector<8xf32>
    %99 = vector.shape_cast %98 : vector<8xf32> to vector<8x1xf32>
    %100 = vector.broadcast %99 : vector<8x1xf32> to vector<8x8xf32>
    %101 = arith.subf %97, %100 : vector<8x8xf32>
    %102 = math.exp %101 : vector<8x8xf32>
    %cst_40 = arith.constant dense<0.000000e+00> : vector<8xf32>
    %103 = vector.multi_reduction <add>, %102, %cst_40 [1] : vector<8x8xf32> to vector<8xf32>
    %104 = vector.shape_cast %103 : vector<8xf32> to vector<8x1xf32>
    %105 = tpu.reciprocal %104 {approx = true} : vector<8x1xf32> -> vector<8x1xf32>
    %106 = vector.broadcast %105 : vector<8x1xf32> to vector<8x8xf32>
    %107 = arith.mulf %102, %106 : vector<8x8xf32>
    %108 = arith.truncf %107 : vector<8x8xf32> to vector<8x8xbf16>
    %109 = vector.extract_strided_slice %27 {offsets = [0, 24], sizes = [8, 8], strides = [1, 1]} : vector<8x32xf32> to vector<8x8xf32>
    %110 = arith.truncf %109 : vector<8x8xf32> to vector<8x8xbf16>
    %cst_41 = arith.constant dense<0.000000e+00> : vector<8x8xf32>
    %111 = tpu.matmul %108, %110, %cst_41 {dimension_numbers = #tpu.dot_dimension_numbers<[1], [0], [0], [1], [0, 0, 1, 1], [], []>} : vector<8x8xbf16>, vector<8x8xbf16>, vector<8x8xf32> -> vector<8x8xf32>
    %112 = tpu.concatenate %48, %69, %90, %111 in 1 : vector<8x8xf32>, vector<8x8xf32>, vector<8x8xf32>, vector<8x8xf32> -> vector<8x32xf32>
    %c0_42 = arith.constant 0 : index
    %c0_43 = arith.constant 0 : index
    %c0_44 = arith.constant 0 : index
    %113 = vector.load %arg10[%c0_42, %c0_43, %c0_44] : memref<1x32x32xbf16, #tpu.memory_space<vmem>>, vector<1x32x32xbf16>
    %114 = vector.shape_cast %113 : vector<1x32x32xbf16> to vector<32x32xbf16>
    %c0_45 = arith.constant 0 : index
    %c0_46 = arith.constant 0 : index
    %c0_47 = arith.constant 0 : index
    %115 = vector.load %arg11[%c0_45, %c0_46, %c0_47] : memref<1x1x32xf32, #tpu.memory_space<vmem>>, vector<1x1x32xf32>
    %116 = vector.shape_cast %115 : vector<1x1x32xf32> to vector<1x32xf32>
    %117 = arith.truncf %112 : vector<8x32xf32> to vector<8x32xbf16>
    %cst_48 = arith.constant dense<0.000000e+00> : vector<8x32xf32>
    %118 = tpu.matmul %117, %114, %cst_48 {dimension_numbers = #tpu.dot_dimension_numbers<[1], [1], [0], [0], [0, 0, 1, 0], [], []>} : vector<8x32xbf16>, vector<32x32xbf16>, vector<8x32xf32> -> vector<8x32xf32>
    %119 = vector.broadcast %116 : vector<1x32xf32> to vector<8x32xf32>
    %120 = arith.addf %118, %119 : vector<8x32xf32>
    %121 = arith.addf %3, %120 : vector<8x32xf32>
    %c0_49 = arith.constant 0 : index
    %c0_50 = arith.constant 0 : index
    %c0_51 = arith.constant 0 : index
    %122 = vector.load %arg12[%c0_49, %c0_50, %c0_51] : memref<1x1x32xf32, #tpu.memory_space<vmem>>, vector<1x1x32xf32>
    %123 = vector.shape_cast %122 : vector<1x1x32xf32> to vector<1x32xf32>
    %c0_52 = arith.constant 0 : index
    %c0_53 = arith.constant 0 : index
    %c0_54 = arith.constant 0 : index
    %124 = vector.load %arg13[%c0_52, %c0_53, %c0_54] : memref<1x1x32xf32, #tpu.memory_space<vmem>>, vector<1x1x32xf32>
    %125 = vector.shape_cast %124 : vector<1x1x32xf32> to vector<1x32xf32>
    %cst_55 = arith.constant dense<0.000000e+00> : vector<8xf32>
    %126 = vector.multi_reduction <add>, %121, %cst_55 [1] : vector<8x32xf32> to vector<8xf32>
    %127 = vector.shape_cast %126 : vector<8xf32> to vector<8x1xf32>
    %cst_56 = arith.constant 3.200000e+01 : f32
    %128 = vector.broadcast %cst_56 : f32 to vector<8x1xf32>
    %129 = arith.divf %127, %128 : vector<8x1xf32>
    %130 = vector.broadcast %129 : vector<8x1xf32> to vector<8x32xf32>
    %131 = arith.subf %121, %130 : vector<8x32xf32>
    %132 = arith.mulf %131, %131 : vector<8x32xf32>
    %cst_57 = arith.constant dense<0.000000e+00> : vector<8xf32>
    %133 = vector.multi_reduction <add>, %132, %cst_57 [1] : vector<8x32xf32> to vector<8xf32>
    %134 = vector.shape_cast %133 : vector<8xf32> to vector<8x1xf32>
    %cst_58 = arith.constant 3.200000e+01 : f32
    %135 = vector.broadcast %cst_58 : f32 to vector<8x1xf32>
    %136 = arith.divf %134, %135 : vector<8x1xf32>
    %137 = vector.broadcast %129 : vector<8x1xf32> to vector<8x32xf32>
    %138 = arith.subf %121, %137 : vector<8x32xf32>
    %cst_59 = arith.constant 9.99999974E-6 : f32
    %139 = vector.broadcast %cst_59 : f32 to vector<8x1xf32>
    %140 = arith.addf %136, %139 : vector<8x1xf32>
    %141 = math.rsqrt %140 : vector<8x1xf32>
    %142 = vector.broadcast %141 : vector<8x1xf32> to vector<8x32xf32>
    %143 = arith.mulf %138, %142 : vector<8x32xf32>
    %144 = vector.broadcast %123 : vector<1x32xf32> to vector<8x32xf32>
    %145 = arith.mulf %143, %144 : vector<8x32xf32>
    %146 = vector.broadcast %125 : vector<1x32xf32> to vector<8x32xf32>
    %147 = arith.addf %145, %146 : vector<8x32xf32>
    %c0_60 = arith.constant 0 : index
    %c0_61 = arith.constant 0 : index
    %c0_62 = arith.constant 0 : index
    %148 = vector.load %arg14[%c0_60, %c0_61, %c0_62] : memref<1x32x32xbf16, #tpu.memory_space<vmem>>, vector<1x32x32xbf16>
    %149 = vector.shape_cast %148 : vector<1x32x32xbf16> to vector<32x32xbf16>
    %c0_63 = arith.constant 0 : index
    %c0_64 = arith.constant 0 : index
    %c0_65 = arith.constant 0 : index
    %150 = vector.load %arg15[%c0_63, %c0_64, %c0_65] : memref<1x1x32xf32, #tpu.memory_space<vmem>>, vector<1x1x32xf32>
    %151 = vector.shape_cast %150 : vector<1x1x32xf32> to vector<1x32xf32>
    %152 = arith.truncf %147 : vector<8x32xf32> to vector<8x32xbf16>
    %cst_66 = arith.constant dense<0.000000e+00> : vector<8x32xf32>
    %153 = tpu.matmul %152, %149, %cst_66 {dimension_numbers = #tpu.dot_dimension_numbers<[1], [1], [0], [0], [0, 0, 1, 0], [], []>} : vector<8x32xbf16>, vector<32x32xbf16>, vector<8x32xf32> -> vector<8x32xf32>
    %154 = vector.broadcast %151 : vector<1x32xf32> to vector<8x32xf32>
    %155 = arith.addf %153, %154 : vector<8x32xf32>
    %cst_67 = arith.constant 0.000000e+00 : f32
    %156 = vector.broadcast %cst_67 : f32 to vector<8x32xf32>
    %157 = arith.maximumf %155, %156 : vector<8x32xf32>
    %c0_68 = arith.constant 0 : index
    %c0_69 = arith.constant 0 : index
    %c0_70 = arith.constant 0 : index
    %158 = vector.load %arg16[%c0_68, %c0_69, %c0_70] : memref<1x32x32xbf16, #tpu.memory_space<vmem>>, vector<1x32x32xbf16>
    %159 = vector.shape_cast %158 : vector<1x32x32xbf16> to vector<32x32xbf16>
    %c0_71 = arith.constant 0 : index
    %c0_72 = arith.constant 0 : index
    %c0_73 = arith.constant 0 : index
    %160 = vector.load %arg17[%c0_71, %c0_72, %c0_73] : memref<1x1x32xf32, #tpu.memory_space<vmem>>, vector<1x1x32xf32>
    %161 = vector.shape_cast %160 : vector<1x1x32xf32> to vector<1x32xf32>
    %162 = arith.truncf %157 : vector<8x32xf32> to vector<8x32xbf16>
    %cst_74 = arith.constant dense<0.000000e+00> : vector<8x32xf32>
    %163 = tpu.matmul %162, %159, %cst_74 {dimension_numbers = #tpu.dot_dimension_numbers<[1], [1], [0], [0], [0, 0, 1, 0], [], []>} : vector<8x32xbf16>, vector<32x32xbf16>, vector<8x32xf32> -> vector<8x32xf32>
    %164 = vector.broadcast %161 : vector<1x32xf32> to vector<8x32xf32>
    %165 = arith.addf %163, %164 : vector<8x32xf32>
    %166 = arith.addf %147, %165 : vector<8x32xf32>
    %c0_75 = arith.constant 0 : index
    %c0_76 = arith.constant 0 : index
    %c0_77 = arith.constant 0 : index
    %167 = vector.load %arg18[%c0_75, %c0_76, %c0_77] : memref<1x1x32xf32, #tpu.memory_space<vmem>>, vector<1x1x32xf32>
    %168 = vector.shape_cast %167 : vector<1x1x32xf32> to vector<1x32xf32>
    %c0_78 = arith.constant 0 : index
    %c0_79 = arith.constant 0 : index
    %c0_80 = arith.constant 0 : index
    %169 = vector.load %arg19[%c0_78, %c0_79, %c0_80] : memref<1x1x32xf32, #tpu.memory_space<vmem>>, vector<1x1x32xf32>
    %170 = vector.shape_cast %169 : vector<1x1x32xf32> to vector<1x32xf32>
    %cst_81 = arith.constant dense<0.000000e+00> : vector<8xf32>
    %171 = vector.multi_reduction <add>, %166, %cst_81 [1] : vector<8x32xf32> to vector<8xf32>
    %172 = vector.shape_cast %171 : vector<8xf32> to vector<8x1xf32>
    %cst_82 = arith.constant 3.200000e+01 : f32
    %173 = vector.broadcast %cst_82 : f32 to vector<8x1xf32>
    %174 = arith.divf %172, %173 : vector<8x1xf32>
    %175 = vector.broadcast %174 : vector<8x1xf32> to vector<8x32xf32>
    %176 = arith.subf %166, %175 : vector<8x32xf32>
    %177 = arith.mulf %176, %176 : vector<8x32xf32>
    %cst_83 = arith.constant dense<0.000000e+00> : vector<8xf32>
    %178 = vector.multi_reduction <add>, %177, %cst_83 [1] : vector<8x32xf32> to vector<8xf32>
    %179 = vector.shape_cast %178 : vector<8xf32> to vector<8x1xf32>
    %cst_84 = arith.constant 3.200000e+01 : f32
    %180 = vector.broadcast %cst_84 : f32 to vector<8x1xf32>
    %181 = arith.divf %179, %180 : vector<8x1xf32>
    %182 = vector.broadcast %174 : vector<8x1xf32> to vector<8x32xf32>
    %183 = arith.subf %166, %182 : vector<8x32xf32>
    %cst_85 = arith.constant 9.99999974E-6 : f32
    %184 = vector.broadcast %cst_85 : f32 to vector<8x1xf32>
    %185 = arith.addf %181, %184 : vector<8x1xf32>
    %186 = math.rsqrt %185 : vector<8x1xf32>
    %187 = vector.broadcast %186 : vector<8x1xf32> to vector<8x32xf32>
    %188 = arith.mulf %183, %187 : vector<8x32xf32>
    %189 = vector.broadcast %168 : vector<1x32xf32> to vector<8x32xf32>
    %190 = arith.mulf %188, %189 : vector<8x32xf32>
    %191 = vector.broadcast %170 : vector<1x32xf32> to vector<8x32xf32>
    %192 = arith.addf %190, %191 : vector<8x32xf32>
    %c0_86 = arith.constant 0 : index
    %c0_87 = arith.constant 0 : index
    %193 = vector.load %arg23[%c0_86, %c0_87] : memref<8x32xf32, #tpu.memory_space<vmem>>, vector<8x32xf32>
    tpu.vector_store %arg23[%c0_86, %c0_87], %192 {strides = array<i32>} : memref<8x32xf32, #tpu.memory_space<vmem>>, vector<8x32xf32>,
    %c1_i32 = arith.constant 1 : i32
    %194 = arith.cmpi eq, %arg1, %c1_i32 : i32
    %195 = arith.extui %194 : i1 to i32
    %c0_i32_88 = arith.constant 0 : i32
    %196 = arith.cmpi ne, %195, %c0_i32_88 : i32
    scf.if %196 {
      %197 = vector.extract_strided_slice %192 {offsets = [0, 0], sizes = [1, 32], strides = [1, 1]} : vector<8x32xf32> to vector<1x32xf32>
      %c0_89 = arith.constant 0 : index
      %c0_90 = arith.constant 0 : index
      %198 = vector.load %arg20[%c0_89, %c0_90] : memref<8x32xf32, #tpu.memory_space<vmem>>, vector<8x32xf32>
      %c0_91 = arith.constant 0 : index
      %c0_92 = arith.constant 0 : index
      %199 = vector.load %arg21[%c0_91, %c0_92] : memref<1x8xf32, #tpu.memory_space<vmem>>, vector<1x8xf32>
      %cst_93 = arith.constant dense<0.000000e+00> : vector<1x8xf32>
      %200 = tpu.matmul %197, %198, %cst_93 {dimension_numbers = #tpu.dot_dimension_numbers<[1], [1], [0], [0], [0, 0, 1, 0], [], []>} : vector<1x32xf32>, vector<8x32xf32>, vector<1x8xf32> -> vector<1x8xf32>
      %201 = arith.addf %200, %199 : vector<1x8xf32>
      %c0_94 = arith.constant 0 : index
      %c0_95 = arith.constant 0 : index
      %c0_96 = arith.constant 0 : index
      %202 = vector.load %arg22[%c0_94, %c0_95, %c0_96] : memref<1x1x8xf32, #tpu.memory_space<vmem>>, vector<1x1x8xf32>
      %203 = vector.shape_cast %202 : vector<1x1x8xf32> to vector<1x8xf32>
      %204 = vector.shape_cast %201 : vector<1x8xf32> to vector<1x1x8xf32>
      tpu.vector_store %arg22[%c0_94, %c0_95, %c0_96], %204 {strides = array<i32>} : memref<1x1x8xf32, #tpu.memory_space<vmem>>, vector<1x1x8xf32>,
    } else {
    }
    return
  }
  func.func @transform_0(%arg0: i32, %arg1: i32) -> (i32, i32, i32) {
    %c0_i32 = arith.constant 0 : i32
    %c0_i32_0 = arith.constant 0 : i32
    %c0_i32_1 = arith.constant 0 : i32
    return %arg0, %c0_i32, %c0_i32_0 : i32, i32, i32
  }
  func.func @transform_1(%arg0: i32, %arg1: i32) -> (i32, i32) {
    %c0_i32 = arith.constant 0 : i32
    %c0_i32_0 = arith.constant 0 : i32
    %c0_i32_1 = arith.constant 0 : i32
    return %c0_i32, %c0_i32_0 : i32, i32
  }
  func.func @transform_2(%arg0: i32, %arg1: i32) -> (i32, i32, i32) {
    %c0_i32 = arith.constant 0 : i32
    %c0_i32_0 = arith.constant 0 : i32
    %c0_i32_1 = arith.constant 0 : i32
    return %arg1, %c0_i32, %c0_i32_0 : i32, i32, i32
  }
  func.func @transform_3(%arg0: i32, %arg1: i32) -> (i32, i32, i32) {
    %c0_i32 = arith.constant 0 : i32
    %c0_i32_0 = arith.constant 0 : i32
    %c0_i32_1 = arith.constant 0 : i32
    return %arg1, %c0_i32, %c0_i32_0 : i32, i32, i32
  }
  func.func @transform_4(%arg0: i32, %arg1: i32) -> (i32, i32, i32) {
    %c0_i32 = arith.constant 0 : i32
    %c0_i32_0 = arith.constant 0 : i32
    %c0_i32_1 = arith.constant 0 : i32
    return %arg1, %c0_i32, %c0_i32_0 : i32, i32, i32
  }
  func.func @transform_5(%arg0: i32, %arg1: i32) -> (i32, i32, i32) {
    %c0_i32 = arith.constant 0 : i32
    %c0_i32_0 = arith.constant 0 : i32
    %c0_i32_1 = arith.constant 0 : i32
    return %arg1, %c0_i32, %c0_i32_0 : i32, i32, i32
  }
  func.func @transform_6(%arg0: i32, %arg1: i32) -> (i32, i32, i32) {
    %c0_i32 = arith.constant 0 : i32
    %c0_i32_0 = arith.constant 0 : i32
    %c0_i32_1 = arith.constant 0 : i32
    return %arg1, %c0_i32, %c0_i32_0 : i32, i32, i32
  }
  func.func @transform_7(%arg0: i32, %arg1: i32) -> (i32, i32, i32) {
    %c0_i32 = arith.constant 0 : i32
    %c0_i32_0 = arith.constant 0 : i32
    %c0_i32_1 = arith.constant 0 : i32
    return %arg1, %c0_i32, %c0_i32_0 : i32, i32, i32
  }
  func.func @transform_8(%arg0: i32, %arg1: i32) -> (i32, i32, i32) {
    %c0_i32 = arith.constant 0 : i32
    %c0_i32_0 = arith.constant 0 : i32
    %c0_i32_1 = arith.constant 0 : i32
    return %arg1, %c0_i32, %c0_i32_0 : i32, i32, i32
  }
  func.func @transform_9(%arg0: i32, %arg1: i32) -> (i32, i32, i32) {
    %c0_i32 = arith.constant 0 : i32
    %c0_i32_0 = arith.constant 0 : i32
    %c0_i32_1 = arith.constant 0 : i32
    return %arg1, %c0_i32, %c0_i32_0 : i32, i32, i32
  }
  func.func @transform_10(%arg0: i32, %arg1: i32) -> (i32, i32, i32) {
    %c0_i32 = arith.constant 0 : i32
    %c0_i32_0 = arith.constant 0 : i32
    %c0_i32_1 = arith.constant 0 : i32
    return %arg1, %c0_i32, %c0_i32_0 : i32, i32, i32
  }
  func.func @transform_11(%arg0: i32, %arg1: i32) -> (i32, i32, i32) {
    %c0_i32 = arith.constant 0 : i32
    %c0_i32_0 = arith.constant 0 : i32
    %c0_i32_1 = arith.constant 0 : i32
    return %arg1, %c0_i32, %c0_i32_0 : i32, i32, i32
  }
  func.func @transform_12(%arg0: i32, %arg1: i32) -> (i32, i32, i32) {
    %c0_i32 = arith.constant 0 : i32
    %c0_i32_0 = arith.constant 0 : i32
    %c0_i32_1 = arith.constant 0 : i32
    return %arg1, %c0_i32, %c0_i32_0 : i32, i32, i32
  }
  func.func @transform_13(%arg0: i32, %arg1: i32) -> (i32, i32, i32) {
    %c0_i32 = arith.constant 0 : i32
    %c0_i32_0 = arith.constant 0 : i32
    %c0_i32_1 = arith.constant 0 : i32
    return %arg1, %c0_i32, %c0_i32_0 : i32, i32, i32
  }
  func.func @transform_14(%arg0: i32, %arg1: i32) -> (i32, i32, i32) {
    %c0_i32 = arith.constant 0 : i32
    %c0_i32_0 = arith.constant 0 : i32
    %c0_i32_1 = arith.constant 0 : i32
    return %arg1, %c0_i32, %c0_i32_0 : i32, i32, i32
  }
  func.func @transform_15(%arg0: i32, %arg1: i32) -> (i32, i32, i32) {
    %c0_i32 = arith.constant 0 : i32
    %c0_i32_0 = arith.constant 0 : i32
    %c0_i32_1 = arith.constant 0 : i32
    return %arg1, %c0_i32, %c0_i32_0 : i32, i32, i32
  }
  func.func @transform_16(%arg0: i32, %arg1: i32) -> (i32, i32, i32) {
    %c0_i32 = arith.constant 0 : i32
    %c0_i32_0 = arith.constant 0 : i32
    %c0_i32_1 = arith.constant 0 : i32
    return %arg1, %c0_i32, %c0_i32_0 : i32, i32, i32
  }
  func.func @transform_17(%arg0: i32, %arg1: i32) -> (i32, i32, i32) {
    %c0_i32 = arith.constant 0 : i32
    %c0_i32_0 = arith.constant 0 : i32
    %c0_i32_1 = arith.constant 0 : i32
    return %arg1, %c0_i32, %c0_i32_0 : i32, i32, i32
  }
  func.func @transform_18(%arg0: i32, %arg1: i32) -> (i32, i32) {
    %c0_i32 = arith.constant 0 : i32
    %c0_i32_0 = arith.constant 0 : i32
    %c0_i32_1 = arith.constant 0 : i32
    return %c0_i32, %c0_i32_0 : i32, i32
  }
  func.func @transform_19(%arg0: i32, %arg1: i32) -> (i32, i32) {
    %c0_i32 = arith.constant 0 : i32
    %c0_i32_0 = arith.constant 0 : i32
    %c0_i32_1 = arith.constant 0 : i32
    return %c0_i32, %c0_i32_0 : i32, i32
  }
  func.func @transform_20(%arg0: i32, %arg1: i32) -> (i32, i32, i32) {
    %c0_i32 = arith.constant 0 : i32
    %c0_i32_0 = arith.constant 0 : i32
    %c0_i32_1 = arith.constant 0 : i32
    return %arg0, %c0_i32, %c0_i32_0 : i32, i32, i32
  }
}

</mosaic_0001>

<llo_original>
// kernel: network_forward.1
$region0: #{network_forward.1}
  #allocation0 [shape = 'u32[]', space=smem, size = 0x4, offset = 0x4, fixed_abs, tag = 'smem constant byte address 0x4 - core index']
  #allocation1 [shape = 'u32[144,128]{1,0:T(1,128)}', space=vmem, size = 0x12000, scoped, tag = 'internal scratch']
  #allocation2 [shape = 'f32[8,32]{1,0:T(8,128)}', space=vmem, size = 0x1000, scoped, tag = 'scratch operand']
  %s0 = inlined_call_operand.vmem [shape: f32[2,8,32], index: 0, kind: input, shape index: {}]
  %s1 = inlined_call_operand.vmem [shape: f32[8,32], index: 1, kind: input, shape index: {}]
  %s2 = inlined_call_operand.vmem [shape: bf16[2,32,32], index: 2, kind: input, shape index: {}]
  %s3 = inlined_call_operand.vmem [shape: f32[2,1,32], index: 3, kind: input, shape index: {}]
  %s4 = inlined_call_operand.vmem [shape: bf16[2,32,32], index: 4, kind: input, shape index: {}]
  %s5 = inlined_call_operand.vmem [shape: f32[2,1,32], index: 5, kind: input, shape index: {}]
  %s6 = inlined_call_operand.vmem [shape: bf16[2,32,32], index: 6, kind: input, shape index: {}]
  %s7 = inlined_call_operand.vmem [shape: f32[2,1,32], index: 7, kind: input, shape index: {}]
  %s8 = inlined_call_operand.vmem [shape: bf16[2,32,32], index: 8, kind: input, shape index: {}]
  %s9 = inlined_call_operand.vmem [shape: f32[2,1,32], index: 9, kind: input, shape index: {}]
  %s10 = inlined_call_operand.vmem [shape: f32[2,1,32], index: 10, kind: input, shape index: {}]
  %s11 = inlined_call_operand.vmem [shape: f32[2,1,32], index: 11, kind: input, shape index: {}]
  %s12 = inlined_call_operand.vmem [shape: bf16[2,32,32], index: 12, kind: input, shape index: {}]
  %s13 = inlined_call_operand.vmem [shape: f32[2,1,32], index: 13, kind: input, shape index: {}]
  %s14 = inlined_call_operand.vmem [shape: bf16[2,32,32], index: 14, kind: input, shape index: {}]
  %s15 = inlined_call_operand.vmem [shape: f32[2,1,32], index: 15, kind: input, shape index: {}]
  %s16 = inlined_call_operand.vmem [shape: f32[2,1,32], index: 16, kind: input, shape index: {}]
  %s17 = inlined_call_operand.vmem [shape: f32[2,1,32], index: 17, kind: input, shape index: {}]
  %s18 = inlined_call_operand.vmem [shape: f32[8,32], index: 18, kind: input, shape index: {}]
  %s19 = inlined_call_operand.vmem [shape: f32[1,8], index: 19, kind: input, shape index: {}]
  %s20 = inlined_call_operand.hbm [shape: f32[2,1,8], index: 20, kind: output, shape index: {}]
  %s21 = sld [smem:[#allocation0]]
  $region121: #{network_forward.1} parent=0
    _
  %s23 = ssub.s32 1, %s21
  %s24 = scalar_select 0, %s23, %s21
  $region1: #{network_forward.1} parent=0
    #allocation3 [shape = 'u8[1024]{0}', space=vmem, size = 0x400, scoped, tag = 'output window, operand 0']
    #allocation4 [shape = 's32[2]{0}', space=sflag, size = 0x8, scoped, tag = 'scoped memory for network_forward.1']
    %25 = vsyncpa [#allocation4], 0
    %s26 = scalar_lea.sflag [#allocation4], 1
    %27 = vsyncpa %s26, 0
    loop: start=0, step=1, limit=6
    $region2: #{network_forward.1} parent=1 // loop_pre_header
      _
    $region3: #{network_forward.1} parent=1 // loop_header
      %s29 = sphi 0, %s33
      %p30 = scmp.ge.s32.totalorder %s29, 6
      %s36 = sphi 0, %s48
      %s37 = sphi 0, %s44
      %s38 = sphi 0, %s36
      %s39 = sphi 0, %s37
      %s40 = sphi 0, %s38
      %s41 = sphi 0, %s39
      %s51 = sphi 0, %s53
      %s54 = sphi 0, %s51
      %s55 = sphi 0, %s54
      %s71 = sphi 0, %s55
      %s75 = sphi 0, %s75
      %s77 = sphi 0, %s75
      %s78 = sphi 0, %s77
      %s92 = sphi 0, %s78
      %s98 = sphi 0, %s100
      %s101 = sphi 0, %s98
      %s102 = sphi 0, %s101
      %s118 = sphi 0, %s102
      %s124 = sphi 0, %s126
      %s127 = sphi 0, %s124
      %s128 = sphi 0, %s127
      %s144 = sphi 0, %s128
      %s150 = sphi 0, %s152
      %s153 = sphi 0, %s150
      %s154 = sphi 0, %s153
      %s170 = sphi 0, %s154
      %s176 = sphi 0, %s178
      %s179 = sphi 0, %s176
      %s180 = sphi 0, %s179
      %s196 = sphi 0, %s180
      %s202 = sphi 0, %s204
      %s205 = sphi 0, %s202
      %s206 = sphi 0, %s205
      %s222 = sphi 0, %s206
      %s228 = sphi 0, %s230
      %s231 = sphi 0, %s228
      %s232 = sphi 0, %s231
      %s248 = sphi 0, %s232
      %s254 = sphi 0, %s256
      %s257 = sphi 0, %s254
      %s258 = sphi 0, %s257
      %s274 = sphi 0, %s258
      %s280 = sphi 0, %s282
      %s283 = sphi 0, %s280
      %s284 = sphi 0, %s283
      %s300 = sphi 0, %s284
      %s306 = sphi 0, %s308
      %s309 = sphi 0, %s306
      %s310 = sphi 0, %s309
      %s326 = sphi 0, %s310
      %s332 = sphi 0, %s334
      %s335 = sphi 0, %s332
      %s336 = sphi 0, %s335
      %s352 = sphi 0, %s336
      %s358 = sphi 0, %s360
      %s361 = sphi 0, %s358
      %s362 = sphi 0, %s361
      %s378 = sphi 0, %s362
      %s384 = sphi 0, %s386
      %s387 = sphi 0, %s384
      %s388 = sphi 0, %s387
      %s404 = sphi 0, %s388
      %s410 = sphi 0, %s412
      %s413 = sphi 0, %s410
      %s414 = sphi 0, %s413
      %s430 = sphi 0, %s414
      %s436 = sphi 0, %s438
      %s439 = sphi 0, %s436
      %s440 = sphi 0, %s439
      %s456 = sphi 0, %s440
      %s462 = sphi 0, %s464
      %s465 = sphi 0, %s462
      %s466 = sphi 0, %s465
      %s482 = sphi 0, %s466
      %s488 = sphi 0, %s490
      %s491 = sphi 0, %s488
      %s492 = sphi 0, %s491
      %s508 = sphi 0, %s492
      %s512 = sphi 0, %s512
      %s514 = sphi 0, %s512
      %s515 = sphi 0, %s514
      %s529 = sphi 0, %s515
      %s533 = sphi 0, %s533
      %s535 = sphi 0, %s533
      %s536 = sphi 0, %s535
      %s550 = sphi 0, %s536
      %s556 = sphi 0, %s558
      %s559 = sphi 0, %s556
      %s560 = sphi 0, %s559
      %s576 = sphi 0, %s560
    $region4: #{network_forward.1} parent=1 // loop_header_branch
      %32 = sbr.rel (%p30) target = $region8
    $region5: #{network_forward.1} parent=1 // loop_body
      %s34 = ssub.s32 %s29, 1
      %s35 = ssub.s32 %s29, 2
      %s42 = sadd.s32 1, %s37
      %p43 = scmp.ge.s32.totalorder %s42, 2
      %s44 = scalar_select %p43, 0, %s42
      %s45 = sadd.s32 1, %s36
      %s46 = scalar_select %p43, %s45, %s36
      %p47 = scmp.ge.s32.totalorder %s46, 2
      %s48 = scalar_select %p47, 0, %s46
      %s49 = ssub.s32 %s36, %s48
      %p50 = scmp.eq.s32.totalorder %s49, 0
      %s52 = sadd.s32 %s51, 1
      %s53 = scalar_select %p50, %s51, %s52
      %p56 = pneg %p50
      %p57 = scmp.eq.s32.totalorder %s29, 3
      %p58 = por %p56, %p57
      %p59 = scmp.ne.s32.totalorder %s51, %s54
      %p60 = scmp.eq.s32.totalorder %s29, 0
      %p61 = por %p59, %p60
      %p62 = scmp.ne.s32.totalorder %s51, %s54
      %p63 = scmp.eq.s32.totalorder %s34, 3
      %p64 = por %p62, %p63
      %p65 = scmp.ne.s32.totalorder %s54, %s55
      %p66 = scmp.eq.s32.totalorder %s34, 0
      %p67 = por %p65, %p66
      %p68 = scmp.ne.s32.totalorder %s54, %s55
      %p69 = scmp.eq.s32.totalorder %s35, 3
      %p70 = por %p68, %p69
      %p72 = scmp.ne.s32.totalorder %s55, %s71
      %p73 = scmp.eq.s32.totalorder %s35, 0
      %p74 = por %p72, %p73
      %s76 = sadd.s32 %s75, 1
      %p79 = scmp.eq.s32.totalorder %s29, 3
      %p80 = scmp.ne.s32.totalorder %s75, %s77
      %p81 = scmp.eq.s32.totalorder %s29, 0
      %p82 = por %p80, %p81
      %p83 = scmp.ne.s32.totalorder %s75, %s77
      %p84 = scmp.eq.s32.totalorder %s34, 3
      %p85 = por %p83, %p84
      %p86 = scmp.ne.s32.totalorder %s77, %s78
      %p87 = scmp.eq.s32.totalorder %s34, 0
      %p88 = por %p86, %p87
      %p89 = scmp.ne.s32.totalorder %s77, %s78
      %p90 = scmp.eq.s32.totalorder %s35, 3
      %p91 = por %p89, %p90
      %p93 = scmp.ne.s32.totalorder %s78, %s92
      %p94 = scmp.eq.s32.totalorder %s35, 0
      %p95 = por %p93, %p94
      %s96 = ssub.s32 %s37, %s44
      %p97 = scmp.eq.s32.totalorder %s96, 0
      %s99 = sadd.s32 %s98, 1
      %s100 = scalar_select %p97, %s98, %s99
      %p103 = pneg %p97
      %p104 = scmp.eq.s32.totalorder %s29, 3
      %p105 = por %p103, %p104
      %p106 = scmp.ne.s32.totalorder %s98, %s101
      %p107 = scmp.eq.s32.totalorder %s29, 0
      %p108 = por %p106, %p107
      %p109 = scmp.ne.s32.totalorder %s98, %s101
      %p110 = scmp.eq.s32.totalorder %s34, 3
      %p111 = por %p109, %p110
      %p112 = scmp.ne.s32.totalorder %s101, %s102
      %p113 = scmp.eq.s32.totalorder %s34, 0
      %p114 = por %p112, %p113
      %p115 = scmp.ne.s32.totalorder %s101, %s102
      %p116 = scmp.eq.s32.totalorder %s35, 3
      %p117 = por %p115, %p116
      %p119 = scmp.ne.s32.totalorder %s102, %s118
      %p120 = scmp.eq.s32.totalorder %s35, 0
      %p121 = por %p119, %p120
      %s122 = ssub.s32 %s37, %s44
      %p123 = scmp.eq.s32.totalorder %s122, 0
      %s125 = sadd.s32 %s124, 1
      %s126 = scalar_select %p123, %s124, %s125
      %p129 = pneg %p123
      %p130 = scmp.eq.s32.totalorder %s29, 3
      %p131 = por %p129, %p130
      %p132 = scmp.ne.s32.totalorder %s124, %s127
      %p133 = scmp.eq.s32.totalorder %s29, 0
      %p134 = por %p132, %p133
      %p135 = scmp.ne.s32.totalorder %s124, %s127
      %p136 = scmp.eq.s32.totalorder %s34, 3
      %p137 = por %p135, %p136
      %p138 = scmp.ne.s32.totalorder %s127, %s128
      %p139 = scmp.eq.s32.totalorder %s34, 0
      %p140 = por %p138, %p139
      %p141 = scmp.ne.s32.totalorder %s127, %s128
      %p142 = scmp.eq.s32.totalorder %s35, 3
      %p143 = por %p141, %p142
      %p145 = scmp.ne.s32.totalorder %s128, %s144
      %p146 = scmp.eq.s32.totalorder %s35, 0
      %p147 = por %p145, %p146
      %s148 = ssub.s32 %s37, %s44
      %p149 = scmp.eq.s32.totalorder %s148, 0
      %s151 = sadd.s32 %s150, 1
      %s152 = scalar_select %p149, %s150, %s151
      %p155 = pneg %p149
      %p156 = scmp.eq.s32.totalorder %s29, 3
      %p157 = por %p155, %p156
      %p158 = scmp.ne.s32.totalorder %s150, %s153
      %p159 = scmp.eq.s32.totalorder %s29, 0
      %p160 = por %p158, %p159
      %p161 = scmp.ne.s32.totalorder %s150, %s153
      %p162 = scmp.eq.s32.totalorder %s34, 3
      %p163 = por %p161, %p162
      %p164 = scmp.ne.s32.totalorder %s153, %s154
      %p165 = scmp.eq.s32.totalorder %s34, 0
      %p166 = por %p164, %p165
      %p167 = scmp.ne.s32.totalorder %s153, %s154
      %p168 = scmp.eq.s32.totalorder %s35, 3
      %p169 = por %p167, %p168
      %p171 = scmp.ne.s32.totalorder %s154, %s170
      %p172 = scmp.eq.s32.totalorder %s35, 0
      %p173 = por %p171, %p172
      %s174 = ssub.s32 %s37, %s44
      %p175 = scmp.eq.s32.totalorder %s174, 0
      %s177 = sadd.s32 %s176, 1
      %s178 = scalar_select %p175, %s176, %s177
      %p181 = pneg %p175
      %p182 = scmp.eq.s32.totalorder %s29, 3
      %p183 = por %p181, %p182
      %p184 = scmp.ne.s32.totalorder %s176, %s179
      %p185 = scmp.eq.s32.totalorder %s29, 0
      %p186 = por %p184, %p185
      %p187 = scmp.ne.s32.totalorder %s176, %s179
      %p188 = scmp.eq.s32.totalorder %s34, 3
      %p189 = por %p187, %p188
      %p190 = scmp.ne.s32.totalorder %s179, %s180
      %p191 = scmp.eq.s32.totalorder %s34, 0
      %p192 = por %p190, %p191
      %p193 = scmp.ne.s32.totalorder %s179, %s180
      %p194 = scmp.eq.s32.totalorder %s35, 3
      %p195 = por %p193, %p194
      %p197 = scmp.ne.s32.totalorder %s180, %s196
      %p198 = scmp.eq.s32.totalorder %s35, 0
      %p199 = por %p197, %p198
      %s200 = ssub.s32 %s37, %s44
      %p201 = scmp.eq.s32.totalorder %s200, 0
      %s203 = sadd.s32 %s202, 1
      %s204 = scalar_select %p201, %s202, %s203
      %p207 = pneg %p201
      %p208 = scmp.eq.s32.totalorder %s29, 3
      %p209 = por %p207, %p208
      %p210 = scmp.ne.s32.totalorder %s202, %s205
      %p211 = scmp.eq.s32.totalorder %s29, 0
      %p212 = por %p210, %p211
      %p213 = scmp.ne.s32.totalorder %s202, %s205
      %p214 = scmp.eq.s32.totalorder %s34, 3
      %p215 = por %p213, %p214
      %p216 = scmp.ne.s32.totalorder %s205, %s206
      %p217 = scmp.eq.s32.totalorder %s34, 0
      %p218 = por %p216, %p217
      %p219 = scmp.ne.s32.totalorder %s205, %s206
      %p220 = scmp.eq.s32.totalorder %s35, 3
      %p221 = por %p219, %p220
      %p223 = scmp.ne.s32.totalorder %s206, %s222
      %p224 = scmp.eq.s32.totalorder %s35, 0
      %p225 = por %p223, %p224
      %s226 = ssub.s32 %s37, %s44
      %p227 = scmp.eq.s32.totalorder %s226, 0
      %s229 = sadd.s32 %s228, 1
      %s230 = scalar_select %p227, %s228, %s229
      %p233 = pneg %p227
      %p234 = scmp.eq.s32.totalorder %s29, 3
      %p235 = por %p233, %p234
      %p236 = scmp.ne.s32.totalorder %s228, %s231
      %p237 = scmp.eq.s32.totalorder %s29, 0
      %p238 = por %p236, %p237
      %p239 = scmp.ne.s32.totalorder %s228, %s231
      %p240 = scmp.eq.s32.totalorder %s34, 3
      %p241 = por %p239, %p240
      %p242 = scmp.ne.s32.totalorder %s231, %s232
      %p243 = scmp.eq.s32.totalorder %s34, 0
      %p244 = por %p242, %p243
      %p245 = scmp.ne.s32.totalorder %s231, %s232
      %p246 = scmp.eq.s32.totalorder %s35, 3
      %p247 = por %p245, %p246
      %p249 = scmp.ne.s32.totalorder %s232, %s248
      %p250 = scmp.eq.s32.totalorder %s35, 0
      %p251 = por %p249, %p250
      %s252 = ssub.s32 %s37, %s44
      %p253 = scmp.eq.s32.totalorder %s252, 0
      %s255 = sadd.s32 %s254, 1
      %s256 = scalar_select %p253, %s254, %s255
      %p259 = pneg %p253
      %p260 = scmp.eq.s32.totalorder %s29, 3
      %p261 = por %p259, %p260
      %p262 = scmp.ne.s32.totalorder %s254, %s257
      %p263 = scmp.eq.s32.totalorder %s29, 0
      %p264 = por %p262, %p263
      %p265 = scmp.ne.s32.totalorder %s254, %s257
      %p266 = scmp.eq.s32.totalorder %s34, 3
      %p267 = por %p265, %p266
      %p268 = scmp.ne.s32.totalorder %s257, %s258
      %p269 = scmp.eq.s32.totalorder %s34, 0
      %p270 = por %p268, %p269
      %p271 = scmp.ne.s32.totalorder %s257, %s258
      %p272 = scmp.eq.s32.totalorder %s35, 3
      %p273 = por %p271, %p272
      %p275 = scmp.ne.s32.totalorder %s258, %s274
      %p276 = scmp.eq.s32.totalorder %s35, 0
      %p277 = por %p275, %p276
      %s278 = ssub.s32 %s37, %s44
      %p279 = scmp.eq.s32.totalorder %s278, 0
      %s281 = sadd.s32 %s280, 1
      %s282 = scalar_select %p279, %s280, %s281
      %p285 = pneg %p279
      %p286 = scmp.eq.s32.totalorder %s29, 3
      %p287 = por %p285, %p286
      %p288 = scmp.ne.s32.totalorder %s280, %s283
      %p289 = scmp.eq.s32.totalorder %s29, 0
      %p290 = por %p288, %p289
      %p291 = scmp.ne.s32.totalorder %s280, %s283
      %p292 = scmp.eq.s32.totalorder %s34, 3
      %p293 = por %p291, %p292
      %p294 = scmp.ne.s32.totalorder %s283, %s284
      %p295 = scmp.eq.s32.totalorder %s34, 0
      %p296 = por %p294, %p295
      %p297 = scmp.ne.s32.totalorder %s283, %s284
      %p298 = scmp.eq.s32.totalorder %s35, 3
      %p299 = por %p297, %p298
      %p301 = scmp.ne.s32.totalorder %s284, %s300
      %p302 = scmp.eq.s32.totalorder %s35, 0
      %p303 = por %p301, %p302
      %s304 = ssub.s32 %s37, %s44
      %p305 = scmp.eq.s32.totalorder %s304, 0
      %s307 = sadd.s32 %s306, 1
      %s308 = scalar_select %p305, %s306, %s307
      %p311 = pneg %p305
      %p312 = scmp.eq.s32.totalorder %s29, 3
      %p313 = por %p311, %p312
      %p314 = scmp.ne.s32.totalorder %s306, %s309
      %p315 = scmp.eq.s32.totalorder %s29, 0
      %p316 = por %p314, %p315
      %p317 = scmp.ne.s32.totalorder %s306, %s309
      %p318 = scmp.eq.s32.totalorder %s34, 3
      %p319 = por %p317, %p318
      %p320 = scmp.ne.s32.totalorder %s309, %s310
      %p321 = scmp.eq.s32.totalorder %s34, 0
      %p322 = por %p320, %p321
      %p323 = scmp.ne.s32.totalorder %s309, %s310
      %p324 = scmp.eq.s32.totalorder %s35, 3
      %p325 = por %p323, %p324
      %p327 = scmp.ne.s32.totalorder %s310, %s326
      %p328 = scmp.eq.s32.totalorder %s35, 0
      %p329 = por %p327, %p328
      %s330 = ssub.s32 %s37, %s44
      %p331 = scmp.eq.s32.totalorder %s330, 0
      %s333 = sadd.s32 %s332, 1
      %s334 = scalar_select %p331, %s332, %s333
      %p337 = pneg %p331
      %p338 = scmp.eq.s32.totalorder %s29, 3
      %p339 = por %p337, %p338
      %p340 = scmp.ne.s32.totalorder %s332, %s335
      %p341 = scmp.eq.s32.totalorder %s29, 0
      %p342 = por %p340, %p341
      %p343 = scmp.ne.s32.totalorder %s332, %s335
      %p344 = scmp.eq.s32.totalorder %s34, 3
      %p345 = por %p343, %p344
      %p346 = scmp.ne.s32.totalorder %s335, %s336
      %p347 = scmp.eq.s32.totalorder %s34, 0
      %p348 = por %p346, %p347
      %p349 = scmp.ne.s32.totalorder %s335, %s336
      %p350 = scmp.eq.s32.totalorder %s35, 3
      %p351 = por %p349, %p350
      %p353 = scmp.ne.s32.totalorder %s336, %s352
      %p354 = scmp.eq.s32.totalorder %s35, 0
      %p355 = por %p353, %p354
      %s356 = ssub.s32 %s37, %s44
      %p357 = scmp.eq.s32.totalorder %s356, 0
      %s359 = sadd.s32 %s358, 1
      %s360 = scalar_select %p357, %s358, %s359
      %p363 = pneg %p357
      %p364 = scmp.eq.s32.totalorder %s29, 3
      %p365 = por %p363, %p364
      %p366 = scmp.ne.s32.totalorder %s358, %s361
      %p367 = scmp.eq.s32.totalorder %s29, 0
      %p368 = por %p366, %p367
      %p369 = scmp.ne.s32.totalorder %s358, %s361
      %p370 = scmp.eq.s32.totalorder %s34, 3
      %p371 = por %p369, %p370
      %p372 = scmp.ne.s32.totalorder %s361, %s362
      %p373 = scmp.eq.s32.totalorder %s34, 0
      %p374 = por %p372, %p373
      %p375 = scmp.ne.s32.totalorder %s361, %s362
      %p376 = scmp.eq.s32.totalorder %s35, 3
      %p377 = por %p375, %p376
      %p379 = scmp.ne.s32.totalorder %s362, %s378
      %p380 = scmp.eq.s32.totalorder %s35, 0
      %p381 = por %p379, %p380
      %s382 = ssub.s32 %s37, %s44
      %p383 = scmp.eq.s32.totalorder %s382, 0
      %s385 = sadd.s32 %s384, 1
      %s386 = scalar_select %p383, %s384, %s385
      %p389 = pneg %p383
      %p390 = scmp.eq.s32.totalorder %s29, 3
      %p391 = por %p389, %p390
      %p392 = scmp.ne.s32.totalorder %s384, %s387
      %p393 = scmp.eq.s32.totalorder %s29, 0
      %p394 = por %p392, %p393
      %p395 = scmp.ne.s32.totalorder %s384, %s387
      %p396 = scmp.eq.s32.totalorder %s34, 3
      %p397 = por %p395, %p396
      %p398 = scmp.ne.s32.totalorder %s387, %s388
      %p399 = scmp.eq.s32.totalorder %s34, 0
      %p400 = por %p398, %p399
      %p401 = scmp.ne.s32.totalorder %s387, %s388
      %p402 = scmp.eq.s32.totalorder %s35, 3
      %p403 = por %p401, %p402
      %p405 = scmp.ne.s32.totalorder %s388, %s404
      %p406 = scmp.eq.s32.totalorder %s35, 0
      %p407 = por %p405, %p406
      %s408 = ssub.s32 %s37, %s44
      %p409 = scmp.eq.s32.totalorder %s408, 0
      %s411 = sadd.s32 %s410, 1
      %s412 = scalar_select %p409, %s410, %s411
      %p415 = pneg %p409
      %p416 = scmp.eq.s32.totalorder %s29, 3
      %p417 = por %p415, %p416
      %p418 = scmp.ne.s32.totalorder %s410, %s413
      %p419 = scmp.eq.s32.totalorder %s29, 0
      %p420 = por %p418, %p419
      %p421 = scmp.ne.s32.totalorder %s410, %s413
      %p422 = scmp.eq.s32.totalorder %s34, 3
      %p423 = por %p421, %p422
      %p424 = scmp.ne.s32.totalorder %s413, %s414
      %p425 = scmp.eq.s32.totalorder %s34, 0
      %p426 = por %p424, %p425
      %p427 = scmp.ne.s32.totalorder %s413, %s414
      %p428 = scmp.eq.s32.totalorder %s35, 3
      %p429 = por %p427, %p428
      %p431 = scmp.ne.s32.totalorder %s414, %s430
      %p432 = scmp.eq.s32.totalorder %s35, 0
      %p433 = por %p431, %p432
      %s434 = ssub.s32 %s37, %s44
      %p435 = scmp.eq.s32.totalorder %s434, 0
      %s437 = sadd.s32 %s436, 1
      %s438 = scalar_select %p435, %s436, %s437
      %p441 = pneg %p435
      %p442 = scmp.eq.s32.totalorder %s29, 3
      %p443 = por %p441, %p442
      %p444 = scmp.ne.s32.totalorder %s436, %s439
      %p445 = scmp.eq.s32.totalorder %s29, 0
      %p446 = por %p444, %p445
      %p447 = scmp.ne.s32.totalorder %s436, %s439
      %p448 = scmp.eq.s32.totalorder %s34, 3
      %p449 = por %p447, %p448
      %p450 = scmp.ne.s32.totalorder %s439, %s440
      %p451 = scmp.eq.s32.totalorder %s34, 0
      %p452 = por %p450, %p451
      %p453 = scmp.ne.s32.totalorder %s439, %s440
      %p454 = scmp.eq.s32.totalorder %s35, 3
      %p455 = por %p453, %p454
      %p457 = scmp.ne.s32.totalorder %s440, %s456
      %p458 = scmp.eq.s32.totalorder %s35, 0
      %p459 = por %p457, %p458
      %s460 = ssub.s32 %s37, %s44
      %p461 = scmp.eq.s32.totalorder %s460, 0
      %s463 = sadd.s32 %s462, 1
      %s464 = scalar_select %p461, %s462, %s463
      %p467 = pneg %p461
      %p468 = scmp.eq.s32.totalorder %s29, 3
      %p469 = por %p467, %p468
      %p470 = scmp.ne.s32.totalorder %s462, %s465
      %p471 = scmp.eq.s32.totalorder %s29, 0
      %p472 = por %p470, %p471
      %p473 = scmp.ne.s32.totalorder %s462, %s465
      %p474 = scmp.eq.s32.totalorder %s34, 3
      %p475 = por %p473, %p474
      %p476 = scmp.ne.s32.totalorder %s465, %s466
      %p477 = scmp.eq.s32.totalorder %s34, 0
      %p478 = por %p476, %p477
      %p479 = scmp.ne.s32.totalorder %s465, %s466
      %p480 = scmp.eq.s32.totalorder %s35, 3
      %p481 = por %p479, %p480
      %p483 = scmp.ne.s32.totalorder %s466, %s482
      %p484 = scmp.eq.s32.totalorder %s35, 0
      %p485 = por %p483, %p484
      %s486 = ssub.s32 %s37, %s44
      %p487 = scmp.eq.s32.totalorder %s486, 0
      %s489 = sadd.s32 %s488, 1
      %s490 = scalar_select %p487, %s488, %s489
      %p493 = pneg %p487
      %p494 = scmp.eq.s32.totalorder %s29, 3
      %p495 = por %p493, %p494
      %p496 = scmp.ne.s32.totalorder %s488, %s491
      %p497 = scmp.eq.s32.totalorder %s29, 0
      %p498 = por %p496, %p497
      %p499 = scmp.ne.s32.totalorder %s488, %s491
      %p500 = scmp.eq.s32.totalorder %s34, 3
      %p501 = por %p499, %p500
      %p502 = scmp.ne.s32.totalorder %s491, %s492
      %p503 = scmp.eq.s32.totalorder %s34, 0
      %p504 = por %p502, %p503
      %p505 = scmp.ne.s32.totalorder %s491, %s492
      %p506 = scmp.eq.s32.totalorder %s35, 3
      %p507 = por %p505, %p506
      %p509 = scmp.ne.s32.totalorder %s492, %s508
      %p510 = scmp.eq.s32.totalorder %s35, 0
      %p511 = por %p509, %p510
      %s513 = sadd.s32 %s512, 1
      %p516 = scmp.eq.s32.totalorder %s29, 3
      %p517 = scmp.ne.s32.totalorder %s512, %s514
      %p518 = scmp.eq.s32.totalorder %s29, 0
      %p519 = por %p517, %p518
      %p520 = scmp.ne.s32.totalorder %s512, %s514
      %p521 = scmp.eq.s32.totalorder %s34, 3
      %p522 = por %p520, %p521
      %p523 = scmp.ne.s32.totalorder %s514, %s515
      %p524 = scmp.eq.s32.totalorder %s34, 0
      %p525 = por %p523, %p524
      %p526 = scmp.ne.s32.totalorder %s514, %s515
      %p527 = scmp.eq.s32.totalorder %s35, 3
      %p528 = por %p526, %p527
      %p530 = scmp.ne.s32.totalorder %s515, %s529
      %p531 = scmp.eq.s32.totalorder %s35, 0
      %p532 = por %p530, %p531
      %s534 = sadd.s32 %s533, 1
      %p537 = scmp.eq.s32.totalorder %s29, 3
      %p538 = scmp.ne.s32.totalorder %s533, %s535
      %p539 = scmp.eq.s32.totalorder %s29, 0
      %p540 = por %p538, %p539
      %p541 = scmp.ne.s32.totalorder %s533, %s535
      %p542 = scmp.eq.s32.totalorder %s34, 3
      %p543 = por %p541, %p542
      %p544 = scmp.ne.s32.totalorder %s535, %s536
      %p545 = scmp.eq.s32.totalorder %s34, 0
      %p546 = por %p544, %p545
      %p547 = scmp.ne.s32.totalorder %s535, %s536
      %p548 = scmp.eq.s32.totalorder %s35, 3
      %p549 = por %p547, %p548
      %p551 = scmp.ne.s32.totalorder %s536, %s550
      %p552 = scmp.eq.s32.totalorder %s35, 0
      %p553 = por %p551, %p552
      %s554 = ssub.s32 %s36, %s48
      %p555 = scmp.eq.s32.totalorder %s554, 0
      %s557 = sadd.s32 %s556, 1
      %s558 = scalar_select %p555, %s556, %s557
      %p561 = pneg %p555
      %p562 = scmp.eq.s32.totalorder %s29, 3
      %p563 = por %p561, %p562
      %p564 = scmp.ne.s32.totalorder %s556, %s559
      %p565 = scmp.eq.s32.totalorder %s29, 0
      %p566 = por %p564, %p565
      %p567 = scmp.ne.s32.totalorder %s556, %s559
      %p568 = scmp.eq.s32.totalorder %s34, 3
      %p569 = por %p567, %p568
      %p570 = scmp.ne.s32.totalorder %s559, %s560
      %p571 = scmp.eq.s32.totalorder %s34, 0
      %p572 = por %p570, %p571
      %p573 = scmp.ne.s32.totalorder %s559, %s560
      %p574 = scmp.eq.s32.totalorder %s35, 3
      %p575 = por %p573, %p574
      %p577 = scmp.ne.s32.totalorder %s560, %s576
      %p578 = scmp.eq.s32.totalorder %s35, 0
      %p579 = por %p577, %p578
      %p580 = scmp.le.s32.totalorder 1, %s29
      %p581 = scmp.lt.s32.totalorder %s29, 5
      %p582 = pnand %p580, %p581
      %p583 = pneg %p582
      // Predicated region
      $region9: #{network_forward.1} parent=5 // pred_check
        _
      $region10: #{network_forward.1} parent=5 // pred_check_branch
        %585 = sbr.rel (%p582) target = $region12
      $region11: #{network_forward.1} parent=5 // pred_region
        %s586 = ssub.s32 %s29, 1
        // Predicated region
        $region13: #{network_forward.1} parent=11 // pred_check
          %p587 = pneg %p88
        $region14: #{network_forward.1} parent=11 // pred_check_branch
          %589 = sbr.rel (%p587) target = $region16
        $region15: #{network_forward.1} parent=11 // pred_region
          _
        $region16: #{network_forward.1} parent=11 // pred_fallthru
          _
        // Predicated region
        $region17: #{network_forward.1} parent=11 // pred_check
          %p590 = pneg %p525
        $region18: #{network_forward.1} parent=11 // pred_check_branch
          %592 = sbr.rel (%p590) target = $region20
        $region19: #{network_forward.1} parent=11 // pred_region
          _
        $region20: #{network_forward.1} parent=11 // pred_fallthru
          _
        // Predicated region
        $region21: #{network_forward.1} parent=11 // pred_check
          %p593 = pneg %p546
        $region22: #{network_forward.1} parent=11 // pred_check_branch
          %595 = sbr.rel (%p593) target = $region24
        $region23: #{network_forward.1} parent=11 // pred_region
          _
        $region24: #{network_forward.1} parent=11 // pred_fallthru
          _
      $region12: #{network_forward.1} parent=5 // pred_fallthru
        _
      %p596 = scmp.lt.s32.totalorder %s29, 4
      // Predicated region
      $region25: #{network_forward.1} parent=5 // pred_check
        %p597 = pneg %p596
      $region26: #{network_forward.1} parent=5 // pred_check_branch
        %599 = sbr.rel (%p597) target = $region28
      $region27: #{network_forward.1} parent=5 // pred_region
        // Predicated region
        $region29: #{network_forward.1} parent=27 // pred_check
          %p600 = pneg %p61
        $region30: #{network_forward.1} parent=27 // pred_check_branch
          %602 = sbr.rel (%p600) target = $region32
        $region31: #{network_forward.1} parent=27 // pred_region
          %p603 = scmp.lt.s32.totalorder %s36, 1
          %s604 = scalar_select %p603, %s36, 1
          %s605 = smul.addr %s604, 8
          %s606 = scalar_lea.vmem %s0, %s605
        $region32: #{network_forward.1} parent=27 // pred_fallthru
          _
        // Predicated region
        $region33: #{network_forward.1} parent=27 // pred_check
          %p607 = pneg %p108
        $region34: #{network_forward.1} parent=27 // pred_check_branch
          %609 = sbr.rel (%p607) target = $region36
        $region35: #{network_forward.1} parent=27 // pred_region
          %p610 = scmp.lt.s32.totalorder %s37, 1
          %s611 = scalar_select %p610, %s37, 1
          %s612 = smul.addr %s611, 4
          %s613 = smul.addr %s612, 4
          %s614 = scalar_lea.vmem %s2, %s613
        $region36: #{network_forward.1} parent=27 // pred_fallthru
          _
        // Predicated region
        $region37: #{network_forward.1} parent=27 // pred_check
          %p615 = pneg %p134
        $region38: #{network_forward.1} parent=27 // pred_check_branch
          %617 = sbr.rel (%p615) target = $region40
        $region39: #{network_forward.1} parent=27 // pred_region
          %p618 = scmp.lt.s32.totalorder %s37, 1
          %s619 = scalar_select %p618, %s37, 1
          %s620 = scalar_lea.vmem %s3, %s619
        $region40: #{network_forward.1} parent=27 // pred_fallthru
          _
        // Predicated region
        $region41: #{network_forward.1} parent=27 // pred_check
          %p621 = pneg %p160
        $region42: #{network_forward.1} parent=27 // pred_check_branch
          %623 = sbr.rel (%p621) target = $region44
        $region43: #{network_forward.1} parent=27 // pred_region
          %p624 = scmp.lt.s32.totalorder %s37, 1
          %s625 = scalar_select %p624, %s37, 1
          %s626 = smul.addr %s625, 4
          %s627 = smul.addr %s626, 4
          %s628 = scalar_lea.vmem %s4, %s627
        $region44: #{network_forward.1} parent=27 // pred_fallthru
          _
        // Predicated region
        $region45: #{network_forward.1} parent=27 // pred_check
          %p629 = pneg %p186
        $region46: #{network_forward.1} parent=27 // pred_check_branch
          %631 = sbr.rel (%p629) target = $region48
        $region47: #{network_forward.1} parent=27 // pred_region
          %p632 = scmp.lt.s32.totalorder %s37, 1
          %s633 = scalar_select %p632, %s37, 1
          %s634 = scalar_lea.vmem %s5, %s633
        $region48: #{network_forward.1} parent=27 // pred_fallthru
          _
        // Predicated region
        $region49: #{network_forward.1} parent=27 // pred_check
          %p635 = pneg %p212
        $region50: #{network_forward.1} parent=27 // pred_check_branch
          %637 = sbr.rel (%p635) target = $region52
        $region51: #{network_forward.1} parent=27 // pred_region
          %p638 = scmp.lt.s32.totalorder %s37, 1
          %s639 = scalar_select %p638, %s37, 1
          %s640 = smul.addr %s639, 4
          %s641 = smul.addr %s640, 4
          %s642 = scalar_lea.vmem %s6, %s641
        $region52: #{network_forward.1} parent=27 // pred_fallthru
          _
        // Predicated region
        $region53: #{network_forward.1} parent=27 // pred_check
          %p643 = pneg %p238
        $region54: #{network_forward.1} parent=27 // pred_check_branch
          %645 = sbr.rel (%p643) target = $region56
        $region55: #{network_forward.1} parent=27 // pred_region
          %p646 = scmp.lt.s32.totalorder %s37, 1
          %s647 = scalar_select %p646, %s37, 1
          %s648 = scalar_lea.vmem %s7, %s647
        $region56: #{network_forward.1} parent=27 // pred_fallthru
          _
        // Predicated region
        $region57: #{network_forward.1} parent=27 // pred_check
          %p649 = pneg %p264
        $region58: #{network_forward.1} parent=27 // pred_check_branch
          %651 = sbr.rel (%p649) target = $region60
        $region59: #{network_forward.1} parent=27 // pred_region
          %p652 = scmp.lt.s32.totalorder %s37, 1
          %s653 = scalar_select %p652, %s37, 1
          %s654 = smul.addr %s653, 4
          %s655 = smul.addr %s654, 4
          %s656 = scalar_lea.vmem %s8, %s655
        $region60: #{network_forward.1} parent=27 // pred_fallthru
          _
        // Predicated region
        $region61: #{network_forward.1} parent=27 // pred_check
          %p657 = pneg %p290
        $region62: #{network_forward.1} parent=27 // pred_check_branch
          %659 = sbr.rel (%p657) target = $region64
        $region63: #{network_forward.1} parent=27 // pred_region
          %p660 = scmp.lt.s32.totalorder %s37, 1
          %s661 = scalar_select %p660, %s37, 1
          %s662 = scalar_lea.vmem %s9, %s661
        $region64: #{network_forward.1} parent=27 // pred_fallthru
          _
        // Predicated region
        $region65: #{network_forward.1} parent=27 // pred_check
          %p663 = pneg %p316
        $region66: #{network_forward.1} parent=27 // pred_check_branch
          %665 = sbr.rel (%p663) target = $region68
        $region67: #{network_forward.1} parent=27 // pred_region
          %p666 = scmp.lt.s32.totalorder %s37, 1
          %s667 = scalar_select %p666, %s37, 1
          %s668 = scalar_lea.vmem %s10, %s667
        $region68: #{network_forward.1} parent=27 // pred_fallthru
          _
        // Predicated region
        $region69: #{network_forward.1} parent=27 // pred_check
          %p669 = pneg %p342
        $region70: #{network_forward.1} parent=27 // pred_check_branch
          %671 = sbr.rel (%p669) target = $region72
        $region71: #{network_forward.1} parent=27 // pred_region
          %p672 = scmp.lt.s32.totalorder %s37, 1
          %s673 = scalar_select %p672, %s37, 1
          %s674 = scalar_lea.vmem %s11, %s673
        $region72: #{network_forward.1} parent=27 // pred_fallthru
          _
        // Predicated region
        $region73: #{network_forward.1} parent=27 // pred_check
          %p675 = pneg %p368
        $region74: #{network_forward.1} parent=27 // pred_check_branch
          %677 = sbr.rel (%p675) target = $region76
        $region75: #{network_forward.1} parent=27 // pred_region
          %p678 = scmp.lt.s32.totalorder %s37, 1
          %s679 = scalar_select %p678, %s37, 1
          %s680 = smul.addr %s679, 4
          %s681 = smul.addr %s680, 4
          %s682 = scalar_lea.vmem %s12, %s681
        $region76: #{network_forward.1} parent=27 // pred_fallthru
          _
        // Predicated region
        $region77: #{network_forward.1} parent=27 // pred_check
          %p683 = pneg %p394
        $region78: #{network_forward.1} parent=27 // pred_check_branch
          %685 = sbr.rel (%p683) target = $region80
        $region79: #{network_forward.1} parent=27 // pred_region
          %p686 = scmp.lt.s32.totalorder %s37, 1
          %s687 = scalar_select %p686, %s37, 1
          %s688 = scalar_lea.vmem %s13, %s687
        $region80: #{network_forward.1} parent=27 // pred_fallthru
          _
        // Predicated region
        $region81: #{network_forward.1} parent=27 // pred_check
          %p689 = pneg %p420
        $region82: #{network_forward.1} parent=27 // pred_check_branch
          %691 = sbr.rel (%p689) target = $region84
        $region83: #{network_forward.1} parent=27 // pred_region
          %p692 = scmp.lt.s32.totalorder %s37, 1
          %s693 = scalar_select %p692, %s37, 1
          %s694 = smul.addr %s693, 4
          %s695 = smul.addr %s694, 4
          %s696 = scalar_lea.vmem %s14, %s695
        $region84: #{network_forward.1} parent=27 // pred_fallthru
          _
        // Predicated region
        $region85: #{network_forward.1} parent=27 // pred_check
          %p697 = pneg %p446
        $region86: #{network_forward.1} parent=27 // pred_check_branch
          %699 = sbr.rel (%p697) target = $region88
        $region87: #{network_forward.1} parent=27 // pred_region
          %p700 = scmp.lt.s32.totalorder %s37, 1
          %s701 = scalar_select %p700, %s37, 1
          %s702 = scalar_lea.vmem %s15, %s701
        $region88: #{network_forward.1} parent=27 // pred_fallthru
          _
        // Predicated region
        $region89: #{network_forward.1} parent=27 // pred_check
          %p703 = pneg %p472
        $region90: #{network_forward.1} parent=27 // pred_check_branch
          %705 = sbr.rel (%p703) target = $region92
        $region91: #{network_forward.1} parent=27 // pred_region
          %p706 = scmp.lt.s32.totalorder %s37, 1
          %s707 = scalar_select %p706, %s37, 1
          %s708 = scalar_lea.vmem %s16, %s707
        $region92: #{network_forward.1} parent=27 // pred_fallthru
          _
        // Predicated region
        $region93: #{network_forward.1} parent=27 // pred_check
          %p709 = pneg %p498
        $region94: #{network_forward.1} parent=27 // pred_check_branch
          %711 = sbr.rel (%p709) target = $region96
        $region95: #{network_forward.1} parent=27 // pred_region
          %p712 = scmp.lt.s32.totalorder %s37, 1
          %s713 = scalar_select %p712, %s37, 1
          %s714 = scalar_lea.vmem %s17, %s713
        $region96: #{network_forward.1} parent=27 // pred_fallthru
          _
      $region28: #{network_forward.1} parent=5 // pred_fallthru
        _
      %p715 = scmp.le.s32.totalorder 1, %s29
      %p716 = scmp.lt.s32.totalorder %s29, 5
      %p717 = pnand %p715, %p716
      %p718 = pneg %p717
      // Predicated region
      $region97: #{network_forward.1} parent=5 // pred_check
        _
      $region98: #{network_forward.1} parent=5 // pred_check_branch
        %720 = sbr.rel (%p717) target = $region100
      $region99: #{network_forward.1} parent=5 // pred_region
        %s721 = ssub.s32 %s29, 1
        %p722 = scmp.lt.s32.totalorder %s38, 1
        %s723 = scalar_select %p722, %s38, 1
        %s724 = smul.addr %s723, 8
        %s725 = scalar_lea.vmem %s0, %s724
        %p726 = pneg %p67
        %p727 = pneg %p64
        %p728 = pneg %p88
        %p729 = pneg %p85
        %p730 = scmp.lt.s32.totalorder %s39, 1
        %s731 = scalar_select %p730, %s39, 1
        %s732 = smul.addr %s731, 4
        %s733 = smul.addr %s732, 4
        %s734 = scalar_lea.vmem %s2, %s733
        %p735 = pneg %p114
        %p736 = pneg %p111
        %p737 = scmp.lt.s32.totalorder %s39, 1
        %s738 = scalar_select %p737, %s39, 1
        %s739 = scalar_lea.vmem %s3, %s738
        %p740 = pneg %p140
        %p741 = pneg %p137
        %p742 = scmp.lt.s32.totalorder %s39, 1
        %s743 = scalar_select %p742, %s39, 1
        %s744 = smul.addr %s743, 4
        %s745 = smul.addr %s744, 4
        %s746 = scalar_lea.vmem %s4, %s745
        %p747 = pneg %p166
        %p748 = pneg %p163
        %p749 = scmp.lt.s32.totalorder %s39, 1
        %s750 = scalar_select %p749, %s39, 1
        %s751 = scalar_lea.vmem %s5, %s750
        %p752 = pneg %p192
        %p753 = pneg %p189
        %p754 = scmp.lt.s32.totalorder %s39, 1
        %s755 = scalar_select %p754, %s39, 1
        %s756 = smul.addr %s755, 4
        %s757 = smul.addr %s756, 4
        %s758 = scalar_lea.vmem %s6, %s757
        %p759 = pneg %p218
        %p760 = pneg %p215
        %p761 = scmp.lt.s32.totalorder %s39, 1
        %s762 = scalar_select %p761, %s39, 1
        %s763 = scalar_lea.vmem %s7, %s762
        %p764 = pneg %p244
        %p765 = pneg %p241
        %p766 = scmp.lt.s32.totalorder %s39, 1
        %s767 = scalar_select %p766, %s39, 1
        %s768 = smul.addr %s767, 4
        %s769 = smul.addr %s768, 4
        %s770 = scalar_lea.vmem %s8, %s769
        %p771 = pneg %p270
        %p772 = pneg %p267
        %p773 = scmp.lt.s32.totalorder %s39, 1
        %s774 = scalar_select %p773, %s39, 1
        %s775 = scalar_lea.vmem %s9, %s774
        %p776 = pneg %p296
        %p777 = pneg %p293
        %p778 = scmp.lt.s32.totalorder %s39, 1
        %s779 = scalar_select %p778, %s39, 1
        %s780 = scalar_lea.vmem %s10, %s779
        %p781 = pneg %p322
        %p782 = pneg %p319
        %p783 = scmp.lt.s32.totalorder %s39, 1
        %s784 = scalar_select %p783, %s39, 1
        %s785 = scalar_lea.vmem %s11, %s784
        %p786 = pneg %p348
        %p787 = pneg %p345
        %p788 = scmp.lt.s32.totalorder %s39, 1
        %s789 = scalar_select %p788, %s39, 1
        %s790 = smul.addr %s789, 4
        %s791 = smul.addr %s790, 4
        %s792 = scalar_lea.vmem %s12, %s791
        %p793 = pneg %p374
        %p794 = pneg %p371
        %p795 = scmp.lt.s32.totalorder %s39, 1
        %s796 = scalar_select %p795, %s39, 1
        %s797 = scalar_lea.vmem %s13, %s796
        %p798 = pneg %p400
        %p799 = pneg %p397
        %p800 = scmp.lt.s32.totalorder %s39, 1
        %s801 = scalar_select %p800, %s39, 1
        %s802 = smul.addr %s801, 4
        %s803 = smul.addr %s802, 4
        %s804 = scalar_lea.vmem %s14, %s803
        %p805 = pneg %p426
        %p806 = pneg %p423
        %p807 = scmp.lt.s32.totalorder %s39, 1
        %s808 = scalar_select %p807, %s39, 1
        %s809 = scalar_lea.vmem %s15, %s808
        %p810 = pneg %p452
        %p811 = pneg %p449
        %p812 = scmp.lt.s32.totalorder %s39, 1
        %s813 = scalar_select %p812, %s39, 1
        %s814 = scalar_lea.vmem %s16, %s813
        %p815 = pneg %p478
        %p816 = pneg %p475
        %p817 = scmp.lt.s32.totalorder %s39, 1
        %s818 = scalar_select %p817, %s39, 1
        %s819 = scalar_lea.vmem %s17, %s818
        %p820 = pneg %p504
        %p821 = pneg %p501
        %p822 = pneg %p525
        %p823 = pneg %p522
        %p824 = pneg %p546
        %p825 = pneg %p543
        %p826 = pneg %p572
        %p827 = pneg %p569
        %s828 = sand.u32 %s559, 1
        %s829 = scalar_lea.sflag [#allocation4], %s828
        %s830 = sand.u32 %s559, 1
        %s831 = scalar_lea.vmem [#allocation3], %s830
        %p832 = scmp.lt.s32.totalorder %s38, 1
        %s833 = scalar_select %p832, %s38, 1
        %s834 = smul.addr %s833, 8
        %s835 = scalar_lea.vmem %s0, %s834
        %p836 = scmp.lt.s32.totalorder %s39, 1
        %s837 = scalar_select %p836, %s39, 1
        %s838 = smul.addr %s837, 4
        %s839 = smul.addr %s838, 4
        %s840 = scalar_lea.vmem %s2, %s839
        %p841 = scmp.lt.s32.totalorder %s39, 1
        %s842 = scalar_select %p841, %s39, 1
        %s843 = scalar_lea.vmem %s3, %s842
        %p844 = scmp.lt.s32.totalorder %s39, 1
        %s845 = scalar_select %p844, %s39, 1
        %s846 = smul.addr %s845, 4
        %s847 = smul.addr %s846, 4
        %s848 = scalar_lea.vmem %s4, %s847
        %p849 = scmp.lt.s32.totalorder %s39, 1
        %s850 = scalar_select %p849, %s39, 1
        %s851 = scalar_lea.vmem %s5, %s850
        %p852 = scmp.lt.s32.totalorder %s39, 1
        %s853 = scalar_select %p852, %s39, 1
        %s854 = smul.addr %s853, 4
        %s855 = smul.addr %s854, 4
        %s856 = scalar_lea.vmem %s6, %s855
        %p857 = scmp.lt.s32.totalorder %s39, 1
        %s858 = scalar_select %p857, %s39, 1
        %s859 = scalar_lea.vmem %s7, %s858
        %p860 = scmp.lt.s32.totalorder %s39, 1
        %s861 = scalar_select %p860, %s39, 1
        %s862 = smul.addr %s861, 4
        %s863 = smul.addr %s862, 4
        %s864 = scalar_lea.vmem %s8, %s863
        %p865 = scmp.lt.s32.totalorder %s39, 1
        %s866 = scalar_select %p865, %s39, 1
        %s867 = scalar_lea.vmem %s9, %s866
        %p868 = scmp.lt.s32.totalorder %s39, 1
        %s869 = scalar_select %p868, %s39, 1
        %s870 = scalar_lea.vmem %s10, %s869
        %p871 = scmp.lt.s32.totalorder %s39, 1
        %s872 = scalar_select %p871, %s39, 1
        %s873 = scalar_lea.vmem %s11, %s872
        %p874 = scmp.lt.s32.totalorder %s39, 1
        %s875 = scalar_select %p874, %s39, 1
        %s876 = smul.addr %s875, 4
        %s877 = smul.addr %s876, 4
        %s878 = scalar_lea.vmem %s12, %s877
        %p879 = scmp.lt.s32.totalorder %s39, 1
        %s880 = scalar_select %p879, %s39, 1
        %s881 = scalar_lea.vmem %s13, %s880
        %p882 = scmp.lt.s32.totalorder %s39, 1
        %s883 = scalar_select %p882, %s39, 1
        %s884 = smul.addr %s883, 4
        %s885 = smul.addr %s884, 4
        %s886 = scalar_lea.vmem %s14, %s885
        %p887 = scmp.lt.s32.totalorder %s39, 1
        %s888 = scalar_select %p887, %s39, 1
        %s889 = scalar_lea.vmem %s15, %s888
        %p890 = scmp.lt.s32.totalorder %s39, 1
        %s891 = scalar_select %p890, %s39, 1
        %s892 = scalar_lea.vmem %s16, %s891
        %p893 = scmp.lt.s32.totalorder %s39, 1
        %s894 = scalar_select %p893, %s39, 1
        %s895 = scalar_lea.vmem %s17, %s894
        %p897 = scmp.eq.s32.totalorder %s39, 0
        // Predicated region
        $region101: #{network_forward.1} parent=99 // pred_check
          %p898 = pneg %p897
        $region102: #{network_forward.1} parent=99 // pred_check_branch
          %900 = sbr.rel (%p898) target = $region104
        $region103: #{network_forward.1} parent=99 // pred_region
          %v901 = vld [vmem:[%s835] sm:$0xff]
          %v902 = vld [vmem:[%s1] sm:$0xff]
          %v903 = vadd.f32 %v901, %v902
          %vm904 = vcmask 261120
          %905 = vst.msk [vmem:[#allocation2] sm:$0xff] %vm904, %v903
        $region104: #{network_forward.1} parent=99 // pred_fallthru
          _
        %v906 = vld [vmem:[#allocation2] sm:$0xff]
        %v907 = vld [vmem:[%s840] sm:$0xf]
        %v908 = vld [vmem:[%s840 + $0x4] sm:$0xf]
        %v909 = vld [vmem:[%s840 + $0x8] sm:$0xf]
        %v910 = vld [vmem:[%s840 + $0xc] sm:$0xf]
        %v911 = vld [vmem:[%s843] sm:$0x1]
        %v912 = vpack.c.bf16 %v906, %v906
        %v914 = vlaneseq
        %v915 = vshrl.u32 %v914, 7
        %v916 = vsub.s32 0, %v915
        %v917 = vrot.slane %v911, %v916
        %v923 = vunpack.c.l.b16 %v907
        %v924 = vunpack.c.l.b16 %v908
        %v925 = vunpack.c.l.b16 %v909
        %v926 = vunpack.c.l.b16 %v910
        %v927 = vpack.c.b16 %v924, %v923
        %v928 = vpack.c.b16 %v926, %v925
        %vm929 = vcmask 261120
        %v931 = vsel %vm929, %v912, 0
        %v934 = vsel %vm929, %v927, 0
        %v937 = vsel %vm929, %v928, 0
        %939 = vmatprep.subr.bf16.mxu0 0
        %940 = vmatpush1.bf16.xpose.msra.mxu0 0
        %941 = vmatprep.subr.bf16.mxu0 0
        %942 = vmatpush1.bf16.xpose.msra.mxu0 0
        %943 = vmatprep.subr.bf16.mxu0 0
        %944 = vmatpush1.bf16.xpose.msra.mxu0 0
        %945 = vmatprep.subr.bf16.mxu0 0
        %946 = vmatpush1.bf16.xpose.msra.mxu0 0
        %947 = vmatprep.subr.bf16.mxu0 0
        %948 = vmatpush1.bf16.xpose.msra.mxu0 0
        %949 = vmatprep.subr.bf16.mxu0 0
        %950 = vmatpush1.bf16.xpose.msra.mxu0 0
        %951 = vmatprep.subr.bf16.mxu0 0
        %952 = vmatpush1.bf16.xpose.msra.mxu0 %v937
        %953 = vmatprep.subr.bf16.mxu0 0
        %954 = vmatpush1.bf16.xpose.msra.mxu0 %v934
        %955 = vmatprep.subr.bf16.mxu0 0
        %956 = vmatpush2.bf16.xpose.msra.mxu0 0
        %957 = vmatprep.subr.bf16.mxu0 0
        %958 = vmatpush2.bf16.xpose.msra.mxu0 0
        %959 = vmatprep.subr.bf16.mxu0 0
        %960 = vmatpush2.bf16.xpose.msra.mxu0 0
        %961 = vmatprep.subr.bf16.mxu0 0
        %962 = vmatpush2.bf16.xpose.msra.mxu0 0
        %963 = vmatprep.subr.bf16.mxu0 0
        %964 = vmatpush2.bf16.xpose.msra.mxu0 0
        %965 = vmatprep.subr.bf16.mxu0 0
        %966 = vmatpush2.bf16.xpose.msra.mxu0 0
        %967 = vmatprep.subr.bf16.mxu0 0
        %968 = vmatpush2.bf16.xpose.msra.mxu0 0
        %969 = vmatprep.subr.bf16.mxu0 0
        %970 = vmatpush2.bf16.xpose.msra.mxu0 0
        %971 = vmatprep.mubr.bf16.mxu0 0
        %972 = vmatmul.mubr.bf16.gmra.mxu0 %v931
        %v973 = vpop.f32.mrf.mxu0
        %v974 = vadd.f32 %v917, %v973
        %v975 = vpop.f32.mrf.mxu0
        %v976 = vpop.f32.mrf.mxu0
        %v977 = vpop.f32.mrf.mxu0
        %978 = vdwg.mxu0
        %v979 = vld [vmem:[%s848] sm:$0xf]
        %v980 = vld [vmem:[%s848 + $0x4] sm:$0xf]
        %v981 = vld [vmem:[%s848 + $0x8] sm:$0xf]
        %v982 = vld [vmem:[%s848 + $0xc] sm:$0xf]
        %v983 = vld [vmem:[%s851] sm:$0x1]
        %v985 = vlaneseq
        %v986 = vshrl.u32 %v985, 7
        %v987 = vsub.s32 0, %v986
        %v988 = vrot.slane %v983, %v987
        %v994 = vunpack.c.l.b16 %v979
        %v995 = vunpack.c.l.b16 %v980
        %v996 = vunpack.c.l.b16 %v981
        %v997 = vunpack.c.l.b16 %v982
        %v998 = vpack.c.b16 %v995, %v994
        %v999 = vpack.c.b16 %v997, %v996
        %v1001 = vsel %vm929, %v998, 0
        %v1004 = vsel %vm929, %v999, 0
        %1006 = vmatprep.subr.bf16.mxu0 0
        %1007 = vmatpush1.bf16.xpose.msra.mxu0 0
        %1008 = vmatprep.subr.bf16.mxu0 0
        %1009 = vmatpush1.bf16.xpose.msra.mxu0 0
        %1010 = vmatprep.subr.bf16.mxu0 0
        %1011 = vmatpush1.bf16.xpose.msra.mxu0 0
        %1012 = vmatprep.subr.bf16.mxu0 0
        %1013 = vmatpush1.bf16.xpose.msra.mxu0 0
        %1014 = vmatprep.subr.bf16.mxu0 0
        %1015 = vmatpush1.bf16.xpose.msra.mxu0 0
        %1016 = vmatprep.subr.bf16.mxu0 0
        %1017 = vmatpush1.bf16.xpose.msra.mxu0 0
        %1018 = vmatprep.subr.bf16.mxu0 0
        %1019 = vmatpush1.bf16.xpose.msra.mxu0 %v1004
        %1020 = vmatprep.subr.bf16.mxu0 0
        %1021 = vmatpush1.bf16.xpose.msra.mxu0 %v1001
        %1022 = vmatprep.subr.bf16.mxu0 0
        %1023 = vmatpush2.bf16.xpose.msra.mxu0 0
        %1024 = vmatprep.subr.bf16.mxu0 0
        %1025 = vmatpush2.bf16.xpose.msra.mxu0 0
        %1026 = vmatprep.subr.bf16.mxu0 0
        %1027 = vmatpush2.bf16.xpose.msra.mxu0 0
        %1028 = vmatprep.subr.bf16.mxu0 0
        %1029 = vmatpush2.bf16.xpose.msra.mxu0 0
        %1030 = vmatprep.subr.bf16.mxu0 0
        %1031 = vmatpush2.bf16.xpose.msra.mxu0 0
        %1032 = vmatprep.subr.bf16.mxu0 0
        %1033 = vmatpush2.bf16.xpose.msra.mxu0 0
        %1034 = vmatprep.subr.bf16.mxu0 0
        %1035 = vmatpush2.bf16.xpose.msra.mxu0 0
        %1036 = vmatprep.subr.bf16.mxu0 0
        %1037 = vmatpush2.bf16.xpose.msra.mxu0 0
        %1038 = vmatprep.mubr.bf16.mxu0 0
        %1039 = vmatmul.mubr.bf16.gmra.mxu0 %v931
        %v1040 = vpop.f32.mrf.mxu0
        %v1041 = vadd.f32 %v988, %v1040
        %v1042 = vpop.f32.mrf.mxu0
        %v1043 = vpop.f32.mrf.mxu0
        %v1044 = vpop.f32.mrf.mxu0
        %1045 = vdwg.mxu0
        %v1046 = vld [vmem:[%s856] sm:$0xf]
        %v1047 = vld [vmem:[%s856 + $0x4] sm:$0xf]
        %v1048 = vld [vmem:[%s856 + $0x8] sm:$0xf]
        %v1049 = vld [vmem:[%s856 + $0xc] sm:$0xf]
        %v1050 = vld [vmem:[%s859] sm:$0x1]
        %v1052 = vlaneseq
        %v1053 = vshrl.u32 %v1052, 7
        %v1054 = vsub.s32 0, %v1053
        %v1055 = vrot.slane %v1050, %v1054
        %v1061 = vunpack.c.l.b16 %v1046
        %v1062 = vunpack.c.l.b16 %v1047
        %v1063 = vunpack.c.l.b16 %v1048
        %v1064 = vunpack.c.l.b16 %v1049
        %v1065 = vpack.c.b16 %v1062, %v1061
        %v1066 = vpack.c.b16 %v1064, %v1063
        %v1068 = vsel %vm929, %v1065, 0
        %v1071 = vsel %vm929, %v1066, 0
        %1073 = vmatprep.subr.bf16.mxu0 0
        %1074 = vmatpush1.bf16.xpose.msra.mxu0 0
        %1075 = vmatprep.subr.bf16.mxu0 0
        %1076 = vmatpush1.bf16.xpose.msra.mxu0 0
        %1077 = vmatprep.subr.bf16.mxu0 0
        %1078 = vmatpush1.bf16.xpose.msra.mxu0 0
        %1079 = vmatprep.subr.bf16.mxu0 0
        %1080 = vmatpush1.bf16.xpose.msra.mxu0 0
        %1081 = vmatprep.subr.bf16.mxu0 0
        %1082 = vmatpush1.bf16.xpose.msra.mxu0 0
        %1083 = vmatprep.subr.bf16.mxu0 0
        %1084 = vmatpush1.bf16.xpose.msra.mxu0 0
        %1085 = vmatprep.subr.bf16.mxu0 0
        %1086 = vmatpush1.bf16.xpose.msra.mxu0 %v1071
        %1087 = vmatprep.subr.bf16.mxu0 0
        %1088 = vmatpush1.bf16.xpose.msra.mxu0 %v1068
        %1089 = vmatprep.subr.bf16.mxu0 0
        %1090 = vmatpush2.bf16.xpose.msra.mxu0 0
        %1091 = vmatprep.subr.bf16.mxu0 0
        %1092 = vmatpush2.bf16.xpose.msra.mxu0 0
        %1093 = vmatprep.subr.bf16.mxu0 0
        %1094 = vmatpush2.bf16.xpose.msra.mxu0 0
        %1095 = vmatprep.subr.bf16.mxu0 0
        %1096 = vmatpush2.bf16.xpose.msra.mxu0 0
        %1097 = vmatprep.subr.bf16.mxu0 0
        %1098 = vmatpush2.bf16.xpose.msra.mxu0 0
        %1099 = vmatprep.subr.bf16.mxu0 0
        %1100 = vmatpush2.bf16.xpose.msra.mxu0 0
        %1101 = vmatprep.subr.bf16.mxu0 0
        %1102 = vmatpush2.bf16.xpose.msra.mxu0 0
        %1103 = vmatprep.subr.bf16.mxu0 0
        %1104 = vmatpush2.bf16.xpose.msra.mxu0 0
        %1105 = vmatprep.mubr.bf16.mxu0 0
        %1106 = vmatmul.mubr.bf16.gmra.mxu0 %v931
        %v1107 = vpop.f32.mrf.mxu0
        %v1108 = vadd.f32 %v1055, %v1107
        %v1109 = vpop.f32.mrf.mxu0
        %v1110 = vpop.f32.mrf.mxu0
        %v1111 = vpop.f32.mrf.mxu0
        %1112 = vdwg.mxu0
        %v1113 = vpack.c.bf16 %v974, %v974
        %v1114 = vpack.c.bf16 %v1041, %v1041
        %vm1115 = vcmask 64512
        %v1117 = vsel %vm1115, %v1113, 0
        %v1120 = vsel %vm1115, %v1114, 0
        %1122 = vmatprep.subr.bf16.mxu0 0
        %1123 = vmatpush1.bf16.xpose.msra.mxu0 0
        %1124 = vmatprep.subr.bf16.mxu0 0
        %1125 = vmatpush1.bf16.xpose.msra.mxu0 0
        %1126 = vmatprep.subr.bf16.mxu0 0
        %1127 = vmatpush1.bf16.xpose.msra.mxu0 0
        %1128 = vmatprep.subr.bf16.mxu0 0
        %1129 = vmatpush1.bf16.xpose.msra.mxu0 0
        %1130 = vmatprep.subr.bf16.mxu0 0
        %1131 = vmatpush1.bf16.xpose.msra.mxu0 0
        %1132 = vmatprep.subr.bf16.mxu0 0
        %1133 = vmatpush1.bf16.xpose.msra.mxu0 0
        %1134 = vmatprep.subr.bf16.mxu0 0
        %1135 = vmatpush1.bf16.xpose.msra.mxu0 0
        %1136 = vmatprep.subr.bf16.mxu0 0
        %1137 = vmatpush1.bf16.xpose.msra.mxu0 %v1120
        %1138 = vmatprep.subr.bf16.mxu0 0
        %1139 = vmatpush2.bf16.xpose.msra.mxu0 0
        %1140 = vmatprep.subr.bf16.mxu0 0
        %1141 = vmatpush2.bf16.xpose.msra.mxu0 0
        %1142 = vmatprep.subr.bf16.mxu0 0
        %1143 = vmatpush2.bf16.xpose.msra.mxu0 0
        %1144 = vmatprep.subr.bf16.mxu0 0
        %1145 = vmatpush2.bf16.xpose.msra.mxu0 0
        %1146 = vmatprep.subr.bf16.mxu0 0
        %1147 = vmatpush2.bf16.xpose.msra.mxu0 0
        %1148 = vmatprep.subr.bf16.mxu0 0
        %1149 = vmatpush2.bf16.xpose.msra.mxu0 0
        %1150 = vmatprep.subr.bf16.mxu0 0
        %1151 = vmatpush2.bf16.xpose.msra.mxu0 0
        %1152 = vmatprep.subr.bf16.mxu0 0
        %1153 = vmatpush2.bf16.xpose.msra.mxu0 0
        %1154 = vmatprep.mubr.bf16.mxu0 0
        %1155 = vmatmul.mubr.bf16.gmra.mxu0 %v1117
        %v1156 = vpop.f32.mrf.mxu0
        %v1157 = vadd.f32 0.0, %v1156
        %v1158 = vpop.f32.mrf.mxu0
        %v1159 = vpop.f32.mrf.mxu0
        %v1160 = vpop.f32.mrf.mxu0
        %1161 = vdwg.mxu0
        %v1162 = vmul.f32 %v1157, 0.35355338
        %v1163 = vsel %vm1115, %v1162, -inf
        %1164 = vmax.xlane.f32.xlu0 %v1163
        %v1165 = vpop.xlane.xlu0 %1164
        %v1166 = vsub.f32 %v1162, %v1165
        %v1167 = vmul.f32 %v1166, 1.442695
        %v1168 = vpow.pop %v1167
        %v1169 = vsel %vm1115, %v1168, 0.0
        %1170 = vadd.xlane.f32.xlu0 %v1169
        %v1171 = vpop.xlane.xlu0 %1170
        %v1172 = vrcp.pop %v1171
        %v1173 = vmul.f32 %v1168, %v1172
        %v1174 = vpack.c.bf16 %v1173, %v1173
        %v1175 = vpack.c.bf16 %v1108, %v1108
        %v1177 = vsel %vm1115, %v1174, 0
        %vm1179 = vcmask 1043456
        %v1181 = vsel %vm1179, %v1175, 0
        %1183 = vmatprep.subr.bf16.mxu0 0
        %1184 = vmatpush1.bf16.msra.mxu0 0
        %1185 = vmatprep.subr.bf16.mxu0 0
        %1186 = vmatpush1.bf16.msra.mxu0 0
        %1187 = vmatprep.subr.bf16.mxu0 0
        %1188 = vmatpush1.bf16.msra.mxu0 0
        %1189 = vmatprep.subr.bf16.mxu0 0
        %1190 = vmatpush1.bf16.msra.mxu0 0
        %1191 = vmatprep.subr.bf16.mxu0 0
        %1192 = vmatpush1.bf16.msra.mxu0 0
        %1193 = vmatprep.subr.bf16.mxu0 0
        %1194 = vmatpush1.bf16.msra.mxu0 0
        %1195 = vmatprep.subr.bf16.mxu0 0
        %1196 = vmatpush1.bf16.msra.mxu0 0
        %1197 = vmatprep.subr.bf16.mxu0 0
        %1198 = vmatpush1.bf16.msra.mxu0 %v1181
        %1199 = vmatprep.subr.bf16.mxu0 0
        %1200 = vmatpush2.bf16.msra.mxu0 0
        %1201 = vmatprep.subr.bf16.mxu0 0
        %1202 = vmatpush2.bf16.msra.mxu0 0
        %1203 = vmatprep.subr.bf16.mxu0 0
        %1204 = vmatpush2.bf16.msra.mxu0 0
        %1205 = vmatprep.subr.bf16.mxu0 0
        %1206 = vmatpush2.bf16.msra.mxu0 0
        %1207 = vmatprep.subr.bf16.mxu0 0
        %1208 = vmatpush2.bf16.msra.mxu0 0
        %1209 = vmatprep.subr.bf16.mxu0 0
        %1210 = vmatpush2.bf16.msra.mxu0 0
        %1211 = vmatprep.subr.bf16.mxu0 0
        %1212 = vmatpush2.bf16.msra.mxu0 0
        %1213 = vmatprep.subr.bf16.mxu0 0
        %1214 = vmatpush2.bf16.msra.mxu0 0
        %1215 = vmatprep.mubr.bf16.mxu0 0
        %1216 = vmatmul.mubr.bf16.gmra.mxu0 %v1177
        %v1217 = vpop.f32.mrf.mxu0
        %v1218 = vadd.f32 0.0, %v1217
        %v1219 = vpop.f32.mrf.mxu0
        %v1220 = vpop.f32.mrf.mxu0
        %v1221 = vpop.f32.mrf.mxu0
        %1222 = vdwg.mxu0
        %1224 = vrot.lane.b32.xlu0 %v1113, 120
        %v1225 = vpop.permute.xlu0 %1224
        %1227 = vrot.lane.b32.xlu0 %v1114, 120
        %v1228 = vpop.permute.xlu0 %1227
        %v1230 = vsel %vm1115, %v1225, 0
        %v1233 = vsel %vm1115, %v1228, 0
        %1235 = vmatprep.subr.bf16.mxu0 0
        %1236 = vmatpush1.bf16.xpose.msra.mxu0 0
        %1237 = vmatprep.subr.bf16.mxu0 0
        %1238 = vmatpush1.bf16.xpose.msra.mxu0 0
        %1239 = vmatprep.subr.bf16.mxu0 0
        %1240 = vmatpush1.bf16.xpose.msra.mxu0 0
        %1241 = vmatprep.subr.bf16.mxu0 0
        %1242 = vmatpush1.bf16.xpose.msra.mxu0 0
        %1243 = vmatprep.subr.bf16.mxu0 0
        %1244 = vmatpush1.bf16.xpose.msra.mxu0 0
        %1245 = vmatprep.subr.bf16.mxu0 0
        %1246 = vmatpush1.bf16.xpose.msra.mxu0 0
        %1247 = vmatprep.subr.bf16.mxu0 0
        %1248 = vmatpush1.bf16.xpose.msra.mxu0 0
        %1249 = vmatprep.subr.bf16.mxu0 0
        %1250 = vmatpush1.bf16.xpose.msra.mxu0 %v1233
        %1251 = vmatprep.subr.bf16.mxu0 0
        %1252 = vmatpush2.bf16.xpose.msra.mxu0 0
        %1253 = vmatprep.subr.bf16.mxu0 0
        %1254 = vmatpush2.bf16.xpose.msra.mxu0 0
        %1255 = vmatprep.subr.bf16.mxu0 0
        %1256 = vmatpush2.bf16.xpose.msra.mxu0 0
        %1257 = vmatprep.subr.bf16.mxu0 0
        %1258 = vmatpush2.bf16.xpose.msra.mxu0 0
        %1259 = vmatprep.subr.bf16.mxu0 0
        %1260 = vmatpush2.bf16.xpose.msra.mxu0 0
        %1261 = vmatprep.subr.bf16.mxu0 0
        %1262 = vmatpush2.bf16.xpose.msra.mxu0 0
        %1263 = vmatprep.subr.bf16.mxu0 0
        %1264 = vmatpush2.bf16.xpose.msra.mxu0 0
        %1265 = vmatprep.subr.bf16.mxu0 0
        %1266 = vmatpush2.bf16.xpose.msra.mxu0 0
        %1267 = vmatprep.mubr.bf16.mxu0 0
        %1268 = vmatmul.mubr.bf16.gmra.mxu0 %v1230
        %v1269 = vpop.f32.mrf.mxu0
        %v1270 = vadd.f32 0.0, %v1269
        %v1271 = vpop.f32.mrf.mxu0
        %v1272 = vpop.f32.mrf.mxu0
        %v1273 = vpop.f32.mrf.mxu0
        %1274 = vdwg.mxu0
        %v1275 = vmul.f32 %v1270, 0.35355338
        %v1276 = vsel %vm1115, %v1275, -inf
        %1277 = vmax.xlane.f32.xlu0 %v1276
        %v1278 = vpop.xlane.xlu0 %1277
        %v1279 = vsub.f32 %v1275, %v1278
        %v1280 = vmul.f32 %v1279, 1.442695
        %v1281 = vpow.pop %v1280
        %v1282 = vsel %vm1115, %v1281, 0.0
        %1283 = vadd.xlane.f32.xlu0 %v1282
        %v1284 = vpop.xlane.xlu0 %1283
        %v1285 = vrcp.pop %v1284
        %v1286 = vmul.f32 %v1281, %v1285
        %v1287 = vpack.c.bf16 %v1286, %v1286
        %1289 = vrot.lane.b32.xlu0 %v1175, 120
        %v1290 = vpop.permute.xlu0 %1289
        %v1292 = vsel %vm1115, %v1287, 0
        %v1295 = vsel %vm1179, %v1290, 0
        %1297 = vmatprep.subr.bf16.mxu0 0
        %1298 = vmatpush1.bf16.msra.mxu0 0
        %1299 = vmatprep.subr.bf16.mxu0 0
        %1300 = vmatpush1.bf16.msra.mxu0 0
        %1301 = vmatprep.subr.bf16.mxu0 0
        %1302 = vmatpush1.bf16.msra.mxu0 0
        %1303 = vmatprep.subr.bf16.mxu0 0
        %1304 = vmatpush1.bf16.msra.mxu0 0
        %1305 = vmatprep.subr.bf16.mxu0 0
        %1306 = vmatpush1.bf16.msra.mxu0 0
        %1307 = vmatprep.subr.bf16.mxu0 0
        %1308 = vmatpush1.bf16.msra.mxu0 0
        %1309 = vmatprep.subr.bf16.mxu0 0
        %1310 = vmatpush1.bf16.msra.mxu0 0
        %1311 = vmatprep.subr.bf16.mxu0 0
        %1312 = vmatpush1.bf16.msra.mxu0 %v1295
        %1313 = vmatprep.subr.bf16.mxu0 0
        %1314 = vmatpush2.bf16.msra.mxu0 0
        %1315 = vmatprep.subr.bf16.mxu0 0
        %1316 = vmatpush2.bf16.msra.mxu0 0
        %1317 = vmatprep.subr.bf16.mxu0 0
        %1318 = vmatpush2.bf16.msra.mxu0 0
        %1319 = vmatprep.subr.bf16.mxu0 0
        %1320 = vmatpush2.bf16.msra.mxu0 0
        %1321 = vmatprep.subr.bf16.mxu0 0
        %1322 = vmatpush2.bf16.msra.mxu0 0
        %1323 = vmatprep.subr.bf16.mxu0 0
        %1324 = vmatpush2.bf16.msra.mxu0 0
        %1325 = vmatprep.subr.bf16.mxu0 0
        %1326 = vmatpush2.bf16.msra.mxu0 0
        %1327 = vmatprep.subr.bf16.mxu0 0
        %1328 = vmatpush2.bf16.msra.mxu0 0
        %1329 = vmatprep.mubr.bf16.mxu0 0
        %1330 = vmatmul.mubr.bf16.gmra.mxu0 %v1292
        %v1331 = vpop.f32.mrf.mxu0
        %v1332 = vadd.f32 0.0, %v1331
        %v1333 = vpop.f32.mrf.mxu0
        %v1334 = vpop.f32.mrf.mxu0
        %v1335 = vpop.f32.mrf.mxu0
        %1336 = vdwg.mxu0
        %1337 = vrot.lane.b32.xlu0 %v1113, 112
        %v1338 = vpop.permute.xlu0 %1337
        %1339 = vrot.lane.b32.xlu0 %v1114, 112
        %v1340 = vpop.permute.xlu0 %1339
        %v1342 = vsel %vm1115, %v1338, 0
        %v1345 = vsel %vm1115, %v1340, 0
        %1347 = vmatprep.subr.bf16.mxu0 0
        %1348 = vmatpush1.bf16.xpose.msra.mxu0 0
        %1349 = vmatprep.subr.bf16.mxu0 0
        %1350 = vmatpush1.bf16.xpose.msra.mxu0 0
        %1351 = vmatprep.subr.bf16.mxu0 0
        %1352 = vmatpush1.bf16.xpose.msra.mxu0 0
        %1353 = vmatprep.subr.bf16.mxu0 0
        %1354 = vmatpush1.bf16.xpose.msra.mxu0 0
        %1355 = vmatprep.subr.bf16.mxu0 0
        %1356 = vmatpush1.bf16.xpose.msra.mxu0 0
        %1357 = vmatprep.subr.bf16.mxu0 0
        %1358 = vmatpush1.bf16.xpose.msra.mxu0 0
        %1359 = vmatprep.subr.bf16.mxu0 0
        %1360 = vmatpush1.bf16.xpose.msra.mxu0 0
        %1361 = vmatprep.subr.bf16.mxu0 0
        %1362 = vmatpush1.bf16.xpose.msra.mxu0 %v1345
        %1363 = vmatprep.subr.bf16.mxu0 0
        %1364 = vmatpush2.bf16.xpose.msra.mxu0 0
        %1365 = vmatprep.subr.bf16.mxu0 0
        %1366 = vmatpush2.bf16.xpose.msra.mxu0 0
        %1367 = vmatprep.subr.bf16.mxu0 0
        %1368 = vmatpush2.bf16.xpose.msra.mxu0 0
        %1369 = vmatprep.subr.bf16.mxu0 0
        %1370 = vmatpush2.bf16.xpose.msra.mxu0 0
        %1371 = vmatprep.subr.bf16.mxu0 0
        %1372 = vmatpush2.bf16.xpose.msra.mxu0 0
        %1373 = vmatprep.subr.bf16.mxu0 0
        %1374 = vmatpush2.bf16.xpose.msra.mxu0 0
        %1375 = vmatprep.subr.bf16.mxu0 0
        %1376 = vmatpush2.bf16.xpose.msra.mxu0 0
        %1377 = vmatprep.subr.bf16.mxu0 0
        %1378 = vmatpush2.bf16.xpose.msra.mxu0 0
        %1379 = vmatprep.mubr.bf16.mxu0 0
        %1380 = vmatmul.mubr.bf16.gmra.mxu0 %v1342
        %v1381 = vpop.f32.mrf.mxu0
        %v1382 = vadd.f32 0.0, %v1381
        %v1383 = vpop.f32.mrf.mxu0
        %v1384 = vpop.f32.mrf.mxu0
        %v1385 = vpop.f32.mrf.mxu0
        %1386 = vdwg.mxu0
        %v1387 = vmul.f32 %v1382, 0.35355338
        %v1388 = vsel %vm1115, %v1387, -inf
        %1389 = vmax.xlane.f32.xlu0 %v1388
        %v1390 = vpop.xlane.xlu0 %1389
        %v1391 = vsub.f32 %v1387, %v1390
        %v1392 = vmul.f32 %v1391, 1.442695
        %v1393 = vpow.pop %v1392
        %v1394 = vsel %vm1115, %v1393, 0.0
        %1395 = vadd.xlane.f32.xlu0 %v1394
        %v1396 = vpop.xlane.xlu0 %1395
        %v1397 = vrcp.pop %v1396
        %v1398 = vmul.f32 %v1393, %v1397
        %v1399 = vpack.c.bf16 %v1398, %v1398
        %1400 = vrot.lane.b32.xlu0 %v1175, 112
        %v1401 = vpop.permute.xlu0 %1400
        %v1403 = vsel %vm1115, %v1399, 0
        %v1406 = vsel %vm1179, %v1401, 0
        %1408 = vmatprep.subr.bf16.mxu0 0
        %1409 = vmatpush1.bf16.msra.mxu0 0
        %1410 = vmatprep.subr.bf16.mxu0 0
        %1411 = vmatpush1.bf16.msra.mxu0 0
        %1412 = vmatprep.subr.bf16.mxu0 0
        %1413 = vmatpush1.bf16.msra.mxu0 0
        %1414 = vmatprep.subr.bf16.mxu0 0
        %1415 = vmatpush1.bf16.msra.mxu0 0
        %1416 = vmatprep.subr.bf16.mxu0 0
        %1417 = vmatpush1.bf16.msra.mxu0 0
        %1418 = vmatprep.subr.bf16.mxu0 0
        %1419 = vmatpush1.bf16.msra.mxu0 0
        %1420 = vmatprep.subr.bf16.mxu0 0
        %1421 = vmatpush1.bf16.msra.mxu0 0
        %1422 = vmatprep.subr.bf16.mxu0 0
        %1423 = vmatpush1.bf16.msra.mxu0 %v1406
        %1424 = vmatprep.subr.bf16.mxu0 0
        %1425 = vmatpush2.bf16.msra.mxu0 0
        %1426 = vmatprep.subr.bf16.mxu0 0
        %1427 = vmatpush2.bf16.msra.mxu0 0
        %1428 = vmatprep.subr.bf16.mxu0 0
        %1429 = vmatpush2.bf16.msra.mxu0 0
        %1430 = vmatprep.subr.bf16.mxu0 0
        %1431 = vmatpush2.bf16.msra.mxu0 0
        %1432 = vmatprep.subr.bf16.mxu0 0
        %1433 = vmatpush2.bf16.msra.mxu0 0
        %1434 = vmatprep.subr.bf16.mxu0 0
        %1435 = vmatpush2.bf16.msra.mxu0 0
        %1436 = vmatprep.subr.bf16.mxu0 0
        %1437 = vmatpush2.bf16.msra.mxu0 0
        %1438 = vmatprep.subr.bf16.mxu0 0
        %1439 = vmatpush2.bf16.msra.mxu0 0
        %1440 = vmatprep.mubr.bf16.mxu0 0
        %1441 = vmatmul.mubr.bf16.gmra.mxu0 %v1403
        %v1442 = vpop.f32.mrf.mxu0
        %v1443 = vadd.f32 0.0, %v1442
        %v1444 = vpop.f32.mrf.mxu0
        %v1445 = vpop.f32.mrf.mxu0
        %v1446 = vpop.f32.mrf.mxu0
        %1447 = vdwg.mxu0
        %1448 = vrot.lane.b32.xlu0 %v1113, 104
        %v1449 = vpop.permute.xlu0 %1448
        %1450 = vrot.lane.b32.xlu0 %v1114, 104
        %v1451 = vpop.permute.xlu0 %1450
        %v1453 = vsel %vm1115, %v1449, 0
        %v1456 = vsel %vm1115, %v1451, 0
        %1458 = vmatprep.subr.bf16.mxu0 0
        %1459 = vmatpush1.bf16.xpose.msra.mxu0 0
        %1460 = vmatprep.subr.bf16.mxu0 0
        %1461 = vmatpush1.bf16.xpose.msra.mxu0 0
        %1462 = vmatprep.subr.bf16.mxu0 0
        %1463 = vmatpush1.bf16.xpose.msra.mxu0 0
        %1464 = vmatprep.subr.bf16.mxu0 0
        %1465 = vmatpush1.bf16.xpose.msra.mxu0 0
        %1466 = vmatprep.subr.bf16.mxu0 0
        %1467 = vmatpush1.bf16.xpose.msra.mxu0 0
        %1468 = vmatprep.subr.bf16.mxu0 0
        %1469 = vmatpush1.bf16.xpose.msra.mxu0 0
        %1470 = vmatprep.subr.bf16.mxu0 0
        %1471 = vmatpush1.bf16.xpose.msra.mxu0 0
        %1472 = vmatprep.subr.bf16.mxu0 0
        %1473 = vmatpush1.bf16.xpose.msra.mxu0 %v1456
        %1474 = vmatprep.subr.bf16.mxu0 0
        %1475 = vmatpush2.bf16.xpose.msra.mxu0 0
        %1476 = vmatprep.subr.bf16.mxu0 0
        %1477 = vmatpush2.bf16.xpose.msra.mxu0 0
        %1478 = vmatprep.subr.bf16.mxu0 0
        %1479 = vmatpush2.bf16.xpose.msra.mxu0 0
        %1480 = vmatprep.subr.bf16.mxu0 0
        %1481 = vmatpush2.bf16.xpose.msra.mxu0 0
        %1482 = vmatprep.subr.bf16.mxu0 0
        %1483 = vmatpush2.bf16.xpose.msra.mxu0 0
        %1484 = vmatprep.subr.bf16.mxu0 0
        %1485 = vmatpush2.bf16.xpose.msra.mxu0 0
        %1486 = vmatprep.subr.bf16.mxu0 0
        %1487 = vmatpush2.bf16.xpose.msra.mxu0 0
        %1488 = vmatprep.subr.bf16.mxu0 0
        %1489 = vmatpush2.bf16.xpose.msra.mxu0 0
        %1490 = vmatprep.mubr.bf16.mxu0 0
        %1491 = vmatmul.mubr.bf16.gmra.mxu0 %v1453
        %v1492 = vpop.f32.mrf.mxu0
        %v1493 = vadd.f32 0.0, %v1492
        %v1494 = vpop.f32.mrf.mxu0
        %v1495 = vpop.f32.mrf.mxu0
        %v1496 = vpop.f32.mrf.mxu0
        %1497 = vdwg.mxu0
        %v1498 = vmul.f32 %v1493, 0.35355338
        %v1499 = vsel %vm1115, %v1498, -inf
        %1500 = vmax.xlane.f32.xlu0 %v1499
        %v1501 = vpop.xlane.xlu0 %1500
        %v1502 = vsub.f32 %v1498, %v1501
        %v1503 = vmul.f32 %v1502, 1.442695
        %v1504 = vpow.pop %v1503
        %v1505 = vsel %vm1115, %v1504, 0.0
        %1506 = vadd.xlane.f32.xlu0 %v1505
        %v1507 = vpop.xlane.xlu0 %1506
        %v1508 = vrcp.pop %v1507
        %v1509 = vmul.f32 %v1504, %v1508
        %v1510 = vpack.c.bf16 %v1509, %v1509
        %1511 = vrot.lane.b32.xlu0 %v1175, 104
        %v1512 = vpop.permute.xlu0 %1511
        %v1514 = vsel %vm1115, %v1510, 0
        %v1517 = vsel %vm1179, %v1512, 0
        %1519 = vmatprep.subr.bf16.mxu0 0
        %1520 = vmatpush1.bf16.msra.mxu0 0
        %1521 = vmatprep.subr.bf16.mxu0 0
        %1522 = vmatpush1.bf16.msra.mxu0 0
        %1523 = vmatprep.subr.bf16.mxu0 0
        %1524 = vmatpush1.bf16.msra.mxu0 0
        %1525 = vmatprep.subr.bf16.mxu0 0
        %1526 = vmatpush1.bf16.msra.mxu0 0
        %1527 = vmatprep.subr.bf16.mxu0 0
        %1528 = vmatpush1.bf16.msra.mxu0 0
        %1529 = vmatprep.subr.bf16.mxu0 0
        %1530 = vmatpush1.bf16.msra.mxu0 0
        %1531 = vmatprep.subr.bf16.mxu0 0
        %1532 = vmatpush1.bf16.msra.mxu0 0
        %1533 = vmatprep.subr.bf16.mxu0 0
        %1534 = vmatpush1.bf16.msra.mxu0 %v1517
        %1535 = vmatprep.subr.bf16.mxu0 0
        %1536 = vmatpush2.bf16.msra.mxu0 0
        %1537 = vmatprep.subr.bf16.mxu0 0
        %1538 = vmatpush2.bf16.msra.mxu0 0
        %1539 = vmatprep.subr.bf16.mxu0 0
        %1540 = vmatpush2.bf16.msra.mxu0 0
        %1541 = vmatprep.subr.bf16.mxu0 0
        %1542 = vmatpush2.bf16.msra.mxu0 0
        %1543 = vmatprep.subr.bf16.mxu0 0
        %1544 = vmatpush2.bf16.msra.mxu0 0
        %1545 = vmatprep.subr.bf16.mxu0 0
        %1546 = vmatpush2.bf16.msra.mxu0 0
        %1547 = vmatprep.subr.bf16.mxu0 0
        %1548 = vmatpush2.bf16.msra.mxu0 0
        %1549 = vmatprep.subr.bf16.mxu0 0
        %1550 = vmatpush2.bf16.msra.mxu0 0
        %1551 = vmatprep.mubr.bf16.mxu0 0
        %1552 = vmatmul.mubr.bf16.gmra.mxu0 %v1514
        %v1553 = vpop.f32.mrf.mxu0
        %v1554 = vadd.f32 0.0, %v1553
        %v1555 = vpop.f32.mrf.mxu0
        %v1556 = vpop.f32.mrf.mxu0
        %v1557 = vpop.f32.mrf.mxu0
        %1558 = vdwg.mxu0
        %1560 = vrot.lane.b32.xlu0 %v1332, 8
        %v1561 = vpop.permute.xlu0 %1560
        %1564 = vrot.lane.b32.xlu0 %v1443, 16
        %v1565 = vpop.permute.xlu0 %1564
        %1568 = vrot.lane.b32.xlu0 %v1554, 24
        %v1569 = vpop.permute.xlu0 %1568
        %v1571 = vsel %vm1115, %v1218, %v1561
        %vm1572 = vcmask 130048
        %v1573 = vsel %vm1572, %v1571, %v1565
        %vm1574 = vcmask 195584
        %v1575 = vsel %vm1574, %v1573, %v1569
        %v1576 = vld [vmem:[%s864] sm:$0xf]
        %v1577 = vld [vmem:[%s864 + $0x4] sm:$0xf]
        %v1578 = vld [vmem:[%s864 + $0x8] sm:$0xf]
        %v1579 = vld [vmem:[%s864 + $0xc] sm:$0xf]
        %v1580 = vld [vmem:[%s867] sm:$0x1]
        %v1581 = vpack.c.bf16 %v1575, %v1575
        %v1583 = vlaneseq
        %v1584 = vshrl.u32 %v1583, 7
        %v1585 = vsub.s32 0, %v1584
        %v1586 = vrot.slane %v1580, %v1585
        %v1592 = vunpack.c.l.b16 %v1576
        %v1593 = vunpack.c.l.b16 %v1577
        %v1594 = vunpack.c.l.b16 %v1578
        %v1595 = vunpack.c.l.b16 %v1579
        %v1596 = vpack.c.b16 %v1593, %v1592
        %v1597 = vpack.c.b16 %v1595, %v1594
        %v1599 = vsel %vm929, %v1581, 0
        %v1602 = vsel %vm929, %v1596, 0
        %v1605 = vsel %vm929, %v1597, 0
        %1607 = vmatprep.subr.bf16.mxu0 0
        %1608 = vmatpush1.bf16.xpose.msra.mxu0 0
        %1609 = vmatprep.subr.bf16.mxu0 0
        %1610 = vmatpush1.bf16.xpose.msra.mxu0 0
        %1611 = vmatprep.subr.bf16.mxu0 0
        %1612 = vmatpush1.bf16.xpose.msra.mxu0 0
        %1613 = vmatprep.subr.bf16.mxu0 0
        %1614 = vmatpush1.bf16.xpose.msra.mxu0 0
        %1615 = vmatprep.subr.bf16.mxu0 0
        %1616 = vmatpush1.bf16.xpose.msra.mxu0 0
        %1617 = vmatprep.subr.bf16.mxu0 0
        %1618 = vmatpush1.bf16.xpose.msra.mxu0 0
        %1619 = vmatprep.subr.bf16.mxu0 0
        %1620 = vmatpush1.bf16.xpose.msra.mxu0 %v1605
        %1621 = vmatprep.subr.bf16.mxu0 0
        %1622 = vmatpush1.bf16.xpose.msra.mxu0 %v1602
        %1623 = vmatprep.subr.bf16.mxu0 0
        %1624 = vmatpush2.bf16.xpose.msra.mxu0 0
        %1625 = vmatprep.subr.bf16.mxu0 0
        %1626 = vmatpush2.bf16.xpose.msra.mxu0 0
        %1627 = vmatprep.subr.bf16.mxu0 0
        %1628 = vmatpush2.bf16.xpose.msra.mxu0 0
        %1629 = vmatprep.subr.bf16.mxu0 0
        %1630 = vmatpush2.bf16.xpose.msra.mxu0 0
        %1631 = vmatprep.subr.bf16.mxu0 0
        %1632 = vmatpush2.bf16.xpose.msra.mxu0 0
        %1633 = vmatprep.subr.bf16.mxu0 0
        %1634 = vmatpush2.bf16.xpose.msra.mxu0 0
        %1635 = vmatprep.subr.bf16.mxu0 0
        %1636 = vmatpush2.bf16.xpose.msra.mxu0 0
        %1637 = vmatprep.subr.bf16.mxu0 0
        %1638 = vmatpush2.bf16.xpose.msra.mxu0 0
        %1639 = vmatprep.mubr.bf16.mxu0 0
        %1640 = vmatmul.mubr.bf16.gmra.mxu0 %v1599
        %v1641 = vpop.f32.mrf.mxu0
        %v1642 = vadd.f32 %v1586, %v1641
        %v1643 = vpop.f32.mrf.mxu0
        %v1644 = vpop.f32.mrf.mxu0
        %v1645 = vpop.f32.mrf.mxu0
        %1646 = vdwg.mxu0
        %v1647 = vadd.f32 %v906, %v1642
        %v1648 = vld [vmem:[%s870] sm:$0x1]
        %v1649 = vld [vmem:[%s873] sm:$0x1]
        %v1650 = vsel %vm929, %v1647, 0.0
        %1651 = vadd.xlane.f32.xlu0 %v1650
        %v1652 = vpop.xlane.xlu0 %1651
        %v1653 = vrcp.pop 32.0
        %v1654 = vmul.f32 %v1652, %v1653
        %v1655 = vsub.f32 %v1647, %v1654
        %v1656 = vmul.f32 %v1655, %v1655
        %v1657 = vsel %vm929, %v1656, 0.0
        %1658 = vadd.xlane.f32.xlu0 %v1657
        %v1659 = vpop.xlane.xlu0 %1658
        %v1660 = vmul.f32 %v1659, %v1653
        %v1661 = vadd.f32 %v1660, 1e-05
        %v1662 = vrsqrt.pop %v1661
        %v1663 = vmul.f32 %v1655, %v1662
        %v1665 = vlaneseq
        %v1666 = vshrl.u32 %v1665, 7
        %v1667 = vsub.s32 0, %v1666
        %v1668 = vrot.slane %v1648, %v1667
        %v1670 = vmul.f32 %v1663, %v1668
        %v1672 = vlaneseq
        %v1673 = vshrl.u32 %v1672, 7
        %v1674 = vsub.s32 0, %v1673
        %v1675 = vrot.slane %v1649, %v1674
        %v1677 = vadd.f32 %v1670, %v1675
        %v1678 = vld [vmem:[%s878] sm:$0xf]
        %v1679 = vld [vmem:[%s878 + $0x4] sm:$0xf]
        %v1680 = vld [vmem:[%s878 + $0x8] sm:$0xf]
        %v1681 = vld [vmem:[%s878 + $0xc] sm:$0xf]
        %v1682 = vld [vmem:[%s881] sm:$0x1]
        %v1683 = vpack.c.bf16 %v1677, %v1677
        %v1685 = vlaneseq
        %v1686 = vshrl.u32 %v1685, 7
        %v1687 = vsub.s32 0, %v1686
        %v1688 = vrot.slane %v1682, %v1687
        %v1694 = vunpack.c.l.b16 %v1678
        %v1695 = vunpack.c.l.b16 %v1679
        %v1696 = vunpack.c.l.b16 %v1680
        %v1697 = vunpack.c.l.b16 %v1681
        %v1698 = vpack.c.b16 %v1695, %v1694
        %v1699 = vpack.c.b16 %v1697, %v1696
        %v1701 = vsel %vm929, %v1683, 0
        %v1704 = vsel %vm929, %v1698, 0
        %v1707 = vsel %vm929, %v1699, 0
        %1709 = vmatprep.subr.bf16.mxu0 0
        %1710 = vmatpush1.bf16.xpose.msra.mxu0 0
        %1711 = vmatprep.subr.bf16.mxu0 0
        %1712 = vmatpush1.bf16.xpose.msra.mxu0 0
        %1713 = vmatprep.subr.bf16.mxu0 0
        %1714 = vmatpush1.bf16.xpose.msra.mxu0 0
        %1715 = vmatprep.subr.bf16.mxu0 0
        %1716 = vmatpush1.bf16.xpose.msra.mxu0 0
        %1717 = vmatprep.subr.bf16.mxu0 0
        %1718 = vmatpush1.bf16.xpose.msra.mxu0 0
        %1719 = vmatprep.subr.bf16.mxu0 0
        %1720 = vmatpush1.bf16.xpose.msra.mxu0 0
        %1721 = vmatprep.subr.bf16.mxu0 0
        %1722 = vmatpush1.bf16.xpose.msra.mxu0 %v1707
        %1723 = vmatprep.subr.bf16.mxu0 0
        %1724 = vmatpush1.bf16.xpose.msra.mxu0 %v1704
        %1725 = vmatprep.subr.bf16.mxu0 0
        %1726 = vmatpush2.bf16.xpose.msra.mxu0 0
        %1727 = vmatprep.subr.bf16.mxu0 0
        %1728 = vmatpush2.bf16.xpose.msra.mxu0 0
        %1729 = vmatprep.subr.bf16.mxu0 0
        %1730 = vmatpush2.bf16.xpose.msra.mxu0 0
        %1731 = vmatprep.subr.bf16.mxu0 0
        %1732 = vmatpush2.bf16.xpose.msra.mxu0 0
        %1733 = vmatprep.subr.bf16.mxu0 0
        %1734 = vmatpush2.bf16.xpose.msra.mxu0 0
        %1735 = vmatprep.subr.bf16.mxu0 0
        %1736 = vmatpush2.bf16.xpose.msra.mxu0 0
        %1737 = vmatprep.subr.bf16.mxu0 0
        %1738 = vmatpush2.bf16.xpose.msra.mxu0 0
        %1739 = vmatprep.subr.bf16.mxu0 0
        %1740 = vmatpush2.bf16.xpose.msra.mxu0 0
        %1741 = vmatprep.mubr.bf16.mxu0 0
        %1742 = vmatmul.mubr.bf16.gmra.mxu0 %v1701
        %v1743 = vpop.f32.mrf.mxu0
        %v1744 = vadd.f32 %v1688, %v1743
        %v1745 = vpop.f32.mrf.mxu0
        %v1746 = vpop.f32.mrf.mxu0
        %v1747 = vpop.f32.mrf.mxu0
        %1748 = vdwg.mxu0
        %v1749 = vmax.f32 %v1744, 0.0
        %v1750 = vld [vmem:[%s886] sm:$0xf]
        %v1751 = vld [vmem:[%s886 + $0x4] sm:$0xf]
        %v1752 = vld [vmem:[%s886 + $0x8] sm:$0xf]
        %v1753 = vld [vmem:[%s886 + $0xc] sm:$0xf]
        %v1754 = vld [vmem:[%s889] sm:$0x1]
        %v1755 = vpack.c.bf16 %v1749, %v1749
        %v1757 = vlaneseq
        %v1758 = vshrl.u32 %v1757, 7
        %v1759 = vsub.s32 0, %v1758
        %v1760 = vrot.slane %v1754, %v1759
        %v1766 = vunpack.c.l.b16 %v1750
        %v1767 = vunpack.c.l.b16 %v1751
        %v1768 = vunpack.c.l.b16 %v1752
        %v1769 = vunpack.c.l.b16 %v1753
        %v1770 = vpack.c.b16 %v1767, %v1766
        %v1771 = vpack.c.b16 %v1769, %v1768
        %v1773 = vsel %vm929, %v1755, 0
        %v1776 = vsel %vm929, %v1770, 0
        %v1779 = vsel %vm929, %v1771, 0
        %1781 = vmatprep.subr.bf16.mxu0 0
        %1782 = vmatpush1.bf16.xpose.msra.mxu0 0
        %1783 = vmatprep.subr.bf16.mxu0 0
        %1784 = vmatpush1.bf16.xpose.msra.mxu0 0
        %1785 = vmatprep.subr.bf16.mxu0 0
        %1786 = vmatpush1.bf16.xpose.msra.mxu0 0
        %1787 = vmatprep.subr.bf16.mxu0 0
        %1788 = vmatpush1.bf16.xpose.msra.mxu0 0
        %1789 = vmatprep.subr.bf16.mxu0 0
        %1790 = vmatpush1.bf16.xpose.msra.mxu0 0
        %1791 = vmatprep.subr.bf16.mxu0 0
        %1792 = vmatpush1.bf16.xpose.msra.mxu0 0
        %1793 = vmatprep.subr.bf16.mxu0 0
        %1794 = vmatpush1.bf16.xpose.msra.mxu0 %v1779
        %1795 = vmatprep.subr.bf16.mxu0 0
        %1796 = vmatpush1.bf16.xpose.msra.mxu0 %v1776
        %1797 = vmatprep.subr.bf16.mxu0 0
        %1798 = vmatpush2.bf16.xpose.msra.mxu0 0
        %1799 = vmatprep.subr.bf16.mxu0 0
        %1800 = vmatpush2.bf16.xpose.msra.mxu0 0
        %1801 = vmatprep.subr.bf16.mxu0 0
        %1802 = vmatpush2.bf16.xpose.msra.mxu0 0
        %1803 = vmatprep.subr.bf16.mxu0 0
        %1804 = vmatpush2.bf16.xpose.msra.mxu0 0
        %1805 = vmatprep.subr.bf16.mxu0 0
        %1806 = vmatpush2.bf16.xpose.msra.mxu0 0
        %1807 = vmatprep.subr.bf16.mxu0 0
        %1808 = vmatpush2.bf16.xpose.msra.mxu0 0
        %1809 = vmatprep.subr.bf16.mxu0 0
        %1810 = vmatpush2.bf16.xpose.msra.mxu0 0
        %1811 = vmatprep.subr.bf16.mxu0 0
        %1812 = vmatpush2.bf16.xpose.msra.mxu0 0
        %1813 = vmatprep.mubr.bf16.mxu0 0
        %1814 = vmatmul.mubr.bf16.gmra.mxu0 %v1773
        %v1815 = vpop.f32.mrf.mxu0
        %v1816 = vadd.f32 %v1760, %v1815
        %v1817 = vpop.f32.mrf.mxu0
        %v1818 = vpop.f32.mrf.mxu0
        %v1819 = vpop.f32.mrf.mxu0
        %1820 = vdwg.mxu0
        %v1821 = vadd.f32 %v1677, %v1816
        %v1822 = vld [vmem:[%s892] sm:$0x1]
        %v1823 = vld [vmem:[%s895] sm:$0x1]
        %v1824 = vsel %vm929, %v1821, 0.0
        %1825 = vadd.xlane.f32.xlu0 %v1824
        %v1826 = vpop.xlane.xlu0 %1825
        %v1827 = vmul.f32 %v1826, %v1653
        %v1828 = vsub.f32 %v1821, %v1827
        %v1829 = vmul.f32 %v1828, %v1828
        %v1830 = vsel %vm929, %v1829, 0.0
        %1831 = vadd.xlane.f32.xlu0 %v1830
        %v1832 = vpop.xlane.xlu0 %1831
        %v1833 = vmul.f32 %v1832, %v1653
        %v1834 = vadd.f32 %v1833, 1e-05
        %v1835 = vrsqrt.pop %v1834
        %v1836 = vmul.f32 %v1828, %v1835
        %v1838 = vlaneseq
        %v1839 = vshrl.u32 %v1838, 7
        %v1840 = vsub.s32 0, %v1839
        %v1841 = vrot.slane %v1822, %v1840
        %v1843 = vmul.f32 %v1836, %v1841
        %v1845 = vlaneseq
        %v1846 = vshrl.u32 %v1845, 7
        %v1847 = vsub.s32 0, %v1846
        %v1848 = vrot.slane %v1823, %v1847
        %v1850 = vadd.f32 %v1843, %v1848
        %1851 = vst.msk [vmem:[#allocation2] sm:$0xff] %vm929, %v1850
        %p1852 = scmp.eq.s32.totalorder %s39, 1
        // Predicated region
        $region105: #{network_forward.1} parent=99 // pred_check
          %p1853 = pneg %p1852
        $region106: #{network_forward.1} parent=99 // pred_check_branch
          %1855 = sbr.rel (%p1853) target = $region108
        $region107: #{network_forward.1} parent=99 // pred_region
          %v1856 = vld [vmem:[%s18] sm:$0xff]
          %v1857 = vld [vmem:[%s19] sm:$0x1]
          %v1859 = vsel %vm929, %v1850, 0
          %v1862 = vsel %vm929, %v1856, 0
          %1864 = vmatprep.subr.mxu0 0.0
          %1865 = vmatpush1.xpose.msra.mxu0 0.0
          %1866 = vmatprep.subr.mxu0 0.0
          %1867 = vmatpush1.xpose.msra.mxu0 0.0
          %1868 = vmatprep.subr.mxu0 0.0
          %1869 = vmatpush1.xpose.msra.mxu0 0.0
          %1870 = vmatprep.subr.mxu0 0.0
          %1871 = vmatpush1.xpose.msra.mxu0 0.0
          %1872 = vmatprep.subr.mxu0 0.0
          %1873 = vmatpush1.xpose.msra.mxu0 0.0
          %1874 = vmatprep.subr.mxu0 0.0
          %1875 = vmatpush1.xpose.msra.mxu0 0.0
          %1876 = vmatprep.subr.mxu0 0.0
          %1877 = vmatpush1.xpose.msra.mxu0 0.0
          %1878 = vmatprep.subr.mxu0 0.0
          %1879 = vmatpush1.xpose.msra.mxu0 0.0
          %1880 = vmatprep.subr.mxu0 0.0
          %1881 = vmatpush1.xpose.msra.mxu0 0.0
          %1882 = vmatprep.subr.mxu0 0.0
          %1883 = vmatpush1.xpose.msra.mxu0 0.0
          %1884 = vmatprep.subr.mxu0 0.0
          %1885 = vmatpush1.xpose.msra.mxu0 0.0
          %1886 = vmatprep.subr.mxu0 0.0
          %1887 = vmatpush1.xpose.msra.mxu0 0.0
          %1888 = vmatprep.subr.mxu0 0.0
          %1889 = vmatpush1.xpose.msra.mxu0 0.0
          %1890 = vmatprep.subr.mxu0 0.0
          %1891 = vmatpush1.xpose.msra.mxu0 0.0
          %1892 = vmatprep.subr.mxu0 0.0
          %1893 = vmatpush1.xpose.msra.mxu0 0.0
          %1894 = vmatprep.subr.mxu0 0.0
          %1895 = vmatpush1.xpose.msra.mxu0 %v1862
          %1896 = vmatprep.subr.mxu0 0.0
          %1897 = vmatpush2.xpose.msra.mxu0 0.0
          %1898 = vmatprep.subr.mxu0 0.0
          %1899 = vmatpush2.xpose.msra.mxu0 0.0
          %1900 = vmatprep.subr.mxu0 0.0
          %1901 = vmatpush2.xpose.msra.mxu0 0.0
          %1902 = vmatprep.subr.mxu0 0.0
          %1903 = vmatpush2.xpose.msra.mxu0 0.0
          %1904 = vmatprep.subr.mxu0 0.0
          %1905 = vmatpush2.xpose.msra.mxu0 0.0
          %1906 = vmatprep.subr.mxu0 0.0
          %1907 = vmatpush2.xpose.msra.mxu0 0.0
          %1908 = vmatprep.subr.mxu0 0.0
          %1909 = vmatpush2.xpose.msra.mxu0 0.0
          %1910 = vmatprep.subr.mxu0 0.0
          %1911 = vmatpush2.xpose.msra.mxu0 0.0
          %1912 = vmatprep.subr.mxu0 0.0
          %1913 = vmatpush2.xpose.msra.mxu0 0.0
          %1914 = vmatprep.subr.mxu0 0.0
          %1915 = vmatpush2.xpose.msra.mxu0 0.0
          %1916 = vmatprep.subr.mxu0 0.0
          %1917 = vmatpush2.xpose.msra.mxu0 0.0
          %1918 = vmatprep.subr.mxu0 0.0
          %1919 = vmatpush2.xpose.msra.mxu0 0.0
          %1920 = vmatprep.subr.mxu0 0.0
          %1921 = vmatpush2.xpose.msra.mxu0 0.0
          %1922 = vmatprep.subr.mxu0 0.0
          %1923 = vmatpush2.xpose.msra.mxu0 0.0
          %1924 = vmatprep.subr.mxu0 0.0
          %1925 = vmatpush2.xpose.msra.mxu0 0.0
          %1926 = vmatprep.subr.mxu0 0.0
          %1927 = vmatpush2.xpose.msra.mxu0 0.0
          %1928 = vmatprep.mubr.f32.mxu0 0.0
          %1929 = vmatmul.mubr.f32.gmra.mxu0 %v1859
          %v1930 = vpop.f32.mrf.mxu0
          %v1931 = vadd.f32 %v1857, %v1930
          %v1932 = vpop.f32.mrf.mxu0
          %1933 = vdwg.mxu0
          %vm1934 = vcmask 57344
          %1935 = vst.msk [vmem:[%s831] sm:$0x1] %vm1934, %v1931
        $region108: #{network_forward.1} parent=99 // pred_fallthru
          _
        %s1936 = sand.u32 %s559, 1
        %s1937 = scalar_lea.sflag [#allocation4], %s1936
        %s1938 = sand.u32 %s559, 1
        %s1939 = scalar_lea.vmem [#allocation3], %s1938
        // Predicated region
        $region109: #{network_forward.1} parent=99 // pred_check
          %p1940 = pneg %p569
        $region110: #{network_forward.1} parent=99 // pred_check_branch
          %1942 = sbr.rel (%p1940) target = $region112
        $region111: #{network_forward.1} parent=99 // pred_region
          %s1944 = ssub.s32 16, 16
          %1945 = vsyncadd %s1937, %s1944
          %s1946 = smul.addr %s38, 16
          %s1947 = scalar_lea.hbm %s20, %s1946
          %s1949 = sshll.u32 %s1939, 4
          %s1950 = int_to_ptr.vmem [resolvable:$true] %s1949
          %1952 = dma.vmem_to_hbm [thread:$0]  %s1950, 16, %s1947, %s1937
        $region112: #{network_forward.1} parent=99 // pred_fallthru
          _
      $region100: #{network_forward.1} parent=5 // pred_fallthru
        _
      %p1953 = scmp.le.s32.totalorder 2, %s29
      // Predicated region
      $region113: #{network_forward.1} parent=5 // pred_check
        %p1954 = pneg %p1953
      $region114: #{network_forward.1} parent=5 // pred_check_branch
        %1956 = sbr.rel (%p1954) target = $region116
      $region115: #{network_forward.1} parent=5 // pred_region
        %s1957 = ssub.s32 %s29, 2
        // Predicated region
        $region117: #{network_forward.1} parent=115 // pred_check
          %p1958 = pneg %p575
        $region118: #{network_forward.1} parent=115 // pred_check_branch
          %1960 = sbr.rel (%p1958) target = $region120
        $region119: #{network_forward.1} parent=115 // pred_region
          %s1961 = sand.u32 %s560, 1
          %s1962 = scalar_lea.sflag [#allocation4], %s1961
          %s1963 = sand.u32 %s560, 1
          %s1964 = scalar_lea.vmem [#allocation3], %s1963
          %1965 = dma.done %s1962, 16
        $region120: #{network_forward.1} parent=115 // pred_fallthru
          _
      $region116: #{network_forward.1} parent=5 // pred_fallthru
        _
    $region6: #{network_forward.1} parent=1 // loop_footer
      %s33 = sadd.s32 1, %s29
    $region7: #{network_forward.1} parent=1 // loop_footer_branch
      %28 = sbr.rel target = $region3
    $region8: #{network_forward.1} parent=1 // loop_exit
      _
    %1966 = vsyncpa [#allocation4], 1
    %s1967 = scalar_lea.sflag [#allocation4], 1
    %1968 = vsyncpa %s1967, 1

</llo_original>
